<compile_context>
chip_gen: v6e
topology: v6e:2x2x1
jax: 0.10.0
libtpu: 0.0.40
codegen_flags: <defaults>
</compile_context>

<pallas_src>
import jax
import jax.numpy as jnp
from jax import lax
from jax.experimental import pallas as pl
from jax.experimental.pallas import tpu as pltpu


# ---------------------------------------------------------------------------
# Host-side constant helpers (tiny; the real work happens in-kernel)
# ---------------------------------------------------------------------------
def _interpolate_message_band(message, H, sh, eh):
    """Rows [sh:eh) of F.interpolate(message.view(B,1,L,1), size=(H, W//2+1),
    mode='bilinear', align_corners=False).  The frequency (W) axis has source
    size 1, so values are constant along it; only the L -> H linear interp
    matters."""
    B, L = message.shape
    scale = L / H
    i = jnp.arange(sh, eh, dtype=jnp.float32)
    src = jnp.maximum((i + 0.5) * scale - 0.5, 0.0)  # PyTorch clamps <0 to 0
    i0 = jnp.minimum(jnp.floor(src).astype(jnp.int32), L - 1)
    i1 = jnp.minimum(i0 + 1, L - 1)
    lam = src - i0.astype(jnp.float32)
    v0 = message[:, i0]
    v1 = message[:, i1]
    return (v0 * (1.0 - lam)[None, :] + v1 * lam[None, :]).astype(jnp.float32)


def _band_bases(H, W, sh, eh, sw, ew):
    """Inverse-DFT bases restricted to the message band (reproduces irfft2):
        zr = M @ Br ; zi = M @ Bi      (inverse real FFT along W, band rows)
        delta = Chi @ zr + Shi @ zi    (inverse complex FFT along H)
    1/H, 1/W norms and the Hermitian fold factor are folded into the bases."""
    h = jnp.arange(H, dtype=jnp.float32)[:, None]
    kh = jnp.arange(sh, eh, dtype=jnp.float32)[None, :]
    ang_h = 2.0 * jnp.pi * h * kh / H
    chi = jnp.cos(ang_h) / H                                  # (H, bh)
    shi = jnp.sin(ang_h) / H                                  # (H, bh)

    kw = jnp.arange(sw, ew, dtype=jnp.float32)[:, None]
    w = jnp.arange(W, dtype=jnp.float32)[None, :]
    ang_w = 2.0 * jnp.pi * kw * w / W
    kidx = jnp.arange(sw, ew)
    fold = jnp.where((kidx == 0) | ((W % 2 == 0) & (kidx == W // 2)), 1.0, 2.0)
    fold = fold.astype(jnp.float32)[:, None]
    br = fold * jnp.cos(ang_w) / W                            # (bw, W)
    bi = -fold * jnp.sin(ang_w) / W                           # (bw, W)
    return chi, shi, br, bi


# ---------------------------------------------------------------------------
# Pallas kernel: one grid step = Tb image planes in their natural layout
# ---------------------------------------------------------------------------
def _kernel(img_ref, mask_ref, chi_ref, shi_ref, br_ref, bi_ref, out_ref):
    tb = img_ref.shape[0]
    chi = chi_ref[...]        # (H, bh)
    shi = shi_ref[...]        # (H, bh)
    br = br_ref[...]          # (bw, W)
    bi = bi_ref[...]          # (bw, W)

    def body(b, carry):
        m = mask_ref[b]                                                   # (bh, bw)
        # inverse real FFT along W first (rows are only the band: bh = H/8)
        zr = jnp.dot(m, br, preferred_element_type=jnp.float32)          # (bh, W)
        zi = jnp.dot(m, bi, preferred_element_type=jnp.float32)          # (bh, W)
        # inverse complex FFT along H
        delta = (jnp.dot(chi, zr, preferred_element_type=jnp.float32)
                 + jnp.dot(shi, zi, preferred_element_type=jnp.float32))  # (H, W)
        # linearity: irfft2(rfft2(x) + mask) == x + irfft2(mask)
        out_ref[b] = jnp.clip(img_ref[b] + delta, 0.0, 1.0)
        return carry

    lax.fori_loop(0, tb, body, 0, unroll=(tb <= 8))


# ---------------------------------------------------------------------------
# Wrapper
# ---------------------------------------------------------------------------
def frequency_domain_embedding(image, message, strength_map):
    """JAX/Pallas equivalent of FrequencyDomainEmbedding.forward.

    image:        (B, C, H, W) float32 in [0, 1]
    message:      (B, L)       float32
    strength_map: (B, C, H, W) float32
    returns:      (B, C, H, W) float32 in [0, 1]
    """
    B, C, H, W = image.shape
    assert H % 8 == 0 and W % 8 == 0, "H, W multiples of 8 assumed (band/tiling)"
    sh, eh = H // 8, H // 4
    sw, ew = W // 8, W // 4
    bh, bw = eh - sh, ew - sw
    N = B * C

    # --- inputs in natural layout (reshapes below are views, no HBM copies) ---
    image_f = image.astype(jnp.float32).reshape(N, H, W)
    msg_rows = _interpolate_message_band(message.astype(jnp.float32), H, sh, eh)
    # Premultiplied band mask: message * strength * 0.1 (tiny: N*bh*bw elems).
    mask_band = (msg_rows[:, None, :, None]
                 * strength_map[:, :, sh:eh, sw:ew].astype(jnp.float32) * 0.1)
    mask_band = mask_band.reshape(N, bh, bw)

    chi, shi, br, bi = _band_bases(H, W, sh, eh, sw, ew)

    # --- plane-batch size Tb: divisor of N, image tile capped at ~2 MiB, and
    #     keep G >= 2 when possible so ("parallel",) feeds both v7x cores. ----
    bytes_per_plane = H * W * 4
    cap_planes = max(1, (2 << 20) // bytes_per_plane)
    divisors = [d for d in range(1, N + 1) if N % d == 0]
    feasible = [d for d in divisors if d <= cap_planes] or [1]
    preferred = [d for d in feasible if N // d >= 2]
    Tb = max(preferred) if preferred else max(feasible)
    G = N // Tb

    # --- VMEM budget (double-buffered in/out/band tiles + bases).  Only raise
    #     vmem_limit_bytes when a single plane alone blows the 16 MiB default
    #     (v5e); never above 48 MiB (v7x has 64 MiB physical). ----------------
    tile_bytes = Tb * H * W * 4
    band_bytes = Tb * bh * bw * 4
    const_bytes = (2 * H * bh + 2 * bw * W) * 4
    vmem_needed = 4 * tile_bytes + 4 * band_bytes + 2 * const_bytes + (1 << 20)
    compiler_kwargs = dict(dimension_semantics=("parallel",))
    if vmem_needed > (16 << 20):
        compiler_kwargs["vmem_limit_bytes"] = int(min(vmem_needed, 48 << 20))

    out = pl.pallas_call(
        _kernel,
        out_shape=jax.ShapeDtypeStruct((N, H, W), jnp.float32),
        grid=(G,),
        in_specs=[
            pl.BlockSpec((Tb, H, W), lambda i: (i, 0, 0)),     # image planes
            pl.BlockSpec((Tb, bh, bw), lambda i: (i, 0, 0)),   # premultiplied band
            pl.BlockSpec((H, bh), lambda i: (0, 0)),           # Chi_b
            pl.BlockSpec((H, bh), lambda i: (0, 0)),           # Shi_b
            pl.BlockSpec((bw, W), lambda i: (0, 0)),           # Br_b
            pl.BlockSpec((bw, W), lambda i: (0, 0)),           # Bi_b
        ],
        out_specs=pl.BlockSpec((Tb, H, W), lambda i: (i, 0, 0)),
        compiler_params=pltpu.CompilerParams(**compiler_kwargs),
    )(image_f, mask_band, chi, shi, br, bi)

    return out.reshape(B, C, H, W)


# ---------------------------------------------------------------------------
# Pure-JAX reference (FFT round trip, mirrors the PyTorch module)
# ---------------------------------------------------------------------------
def _reference(image, message, strength_map):
    B, C, H, W = image.shape
    sh, eh = H // 8, H // 4
    sw, ew = W // 8, W // 4
    freq = jnp.fft.rfft2(image.astype(jnp.float32))
    msg_rows = _interpolate_message_band(message.astype(jnp.float32), H, sh, eh)
    band = (msg_rows[:, None, :, None]
            * strength_map[:, :, sh:eh, sw:ew].astype(jnp.float32) * 0.1)
    mask = jnp.zeros_like(freq).at[:, :, sh:eh, sw:ew].set(band.astype(freq.dtype))
    out = jnp.fft.irfft2(freq + mask, s=(H, W))
    return jnp.clip(out, 0.0, 1.0)


# ---------------------------------------------------------------------------
if __name__ == "__main__":
    B, C, H, W = 2, 4, 16, 16
    L = 8  # message length

    key = jax.random.PRNGKey(0)
    k1, k2, k3 = jax.random.split(key, 3)
    image = jax.random.uniform(k1, (B, C, H, W), dtype=jnp.float32)
    message = jax.random.uniform(k2, (B, L), dtype=jnp.float32)
    strength_map = jax.random.uniform(k3, (B, C, H, W), dtype=jnp.float32)

    out = frequency_domain_embedding(image, message, strength_map)
    out = jax.block_until_ready(out)

    assert out.shape == (B, C, H, W)
    assert bool(jnp.all(jnp.isfinite(out)))
    assert bool(jnp.all((out >= 0.0) & (out <= 1.0)))

    ref = jax.block_until_ready(_reference(image, message, strength_map))
    max_err = float(jnp.max(jnp.abs(out - ref)))
    assert max_err < 1e-4, f"mismatch vs FFT reference: {max_err}"

    print("KERNEL_OK")
</pallas_src>

<mosaic_0001>
module attributes {stable_mosaic.version = 11 : i64} {
  func.func @_kernel(%arg0: i32, %arg1: memref<4x16x16xf32, #tpu.memory_space<vmem>>, %arg2: memref<4x2x2xf32, #tpu.memory_space<vmem>>, %arg3: memref<16x2xf32, #tpu.memory_space<vmem>>, %arg4: memref<16x2xf32, #tpu.memory_space<vmem>>, %arg5: memref<2x16xf32, #tpu.memory_space<vmem>>, %arg6: memref<2x16xf32, #tpu.memory_space<vmem>>, %arg7: memref<4x16x16xf32, #tpu.memory_space<vmem>>) attributes {dimension_semantics = [#tpu.dimension_semantics<parallel>], iteration_bounds = array<i64: 2>, scalar_prefetch = 0 : i64, scratch_operands = 0 : i64, tpu.core_type = #tpu.core_type<tc>, window_params = [{transform_indices = @transform_0, window_bounds = array<i64: 4, 16, 16>}, {transform_indices = @transform_1, window_bounds = array<i64: 4, 2, 2>}, {pipeline_mode = #tpu.pipeline_mode<synchronous>, transform_indices = @transform_2, window_bounds = array<i64: 16, 2>}, {pipeline_mode = #tpu.pipeline_mode<synchronous>, transform_indices = @transform_3, window_bounds = array<i64: 16, 2>}, {pipeline_mode = #tpu.pipeline_mode<synchronous>, transform_indices = @transform_4, window_bounds = array<i64: 2, 16>}, {pipeline_mode = #tpu.pipeline_mode<synchronous>, transform_indices = @transform_5, window_bounds = array<i64: 2, 16>}, {transform_indices = @transform_6, window_bounds = array<i64: 4, 16, 16>}]} {
    %c0 = arith.constant 0 : index
    %c0_0 = arith.constant 0 : index
    %0 = vector.load %arg3[%c0, %c0_0] : memref<16x2xf32, #tpu.memory_space<vmem>>, vector<16x2xf32>
    %c0_1 = arith.constant 0 : index
    %c0_2 = arith.constant 0 : index
    %1 = vector.load %arg4[%c0_1, %c0_2] : memref<16x2xf32, #tpu.memory_space<vmem>>, vector<16x2xf32>
    %c0_3 = arith.constant 0 : index
    %c0_4 = arith.constant 0 : index
    %2 = vector.load %arg5[%c0_3, %c0_4] : memref<2x16xf32, #tpu.memory_space<vmem>>, vector<2x16xf32>
    %c0_5 = arith.constant 0 : index
    %c0_6 = arith.constant 0 : index
    %3 = vector.load %arg6[%c0_5, %c0_6] : memref<2x16xf32, #tpu.memory_space<vmem>>, vector<2x16xf32>
    %c0_i32 = arith.constant 0 : i32
    %4 = arith.index_cast %c0_i32 : i32 to index
    %c0_7 = arith.constant 0 : index
    %c0_8 = arith.constant 0 : index
    %5 = vector.load %arg2[%4, %c0_7, %c0_8] : memref<4x2x2xf32, #tpu.memory_space<vmem>>, vector<1x2x2xf32>
    %6 = vector.shape_cast %5 : vector<1x2x2xf32> to vector<2x2xf32>
    %cst = arith.constant dense<0.000000e+00> : vector<2x16xf32>
    %7 = tpu.matmul %6, %2, %cst {dimension_numbers = #tpu.dot_dimension_numbers<[1], [0], [0], [1], [0, 0, 1, 1], [], []>} : vector<2x2xf32>, vector<2x16xf32>, vector<2x16xf32> -> vector<2x16xf32>
    %cst_9 = arith.constant dense<0.000000e+00> : vector<2x16xf32>
    %8 = tpu.matmul %6, %3, %cst_9 {dimension_numbers = #tpu.dot_dimension_numbers<[1], [0], [0], [1], [0, 0, 1, 1], [], []>} : vector<2x2xf32>, vector<2x16xf32>, vector<2x16xf32> -> vector<2x16xf32>
    %cst_10 = arith.constant dense<0.000000e+00> : vector<16x16xf32>
    %9 = tpu.matmul %0, %7, %cst_10 {dimension_numbers = #tpu.dot_dimension_numbers<[1], [0], [0], [1], [0, 0, 1, 1], [], []>} : vector<16x2xf32>, vector<2x16xf32>, vector<16x16xf32> -> vector<16x16xf32>
    %cst_11 = arith.constant dense<0.000000e+00> : vector<16x16xf32>
    %10 = tpu.matmul %1, %8, %cst_11 {dimension_numbers = #tpu.dot_dimension_numbers<[1], [0], [0], [1], [0, 0, 1, 1], [], []>} : vector<16x2xf32>, vector<2x16xf32>, vector<16x16xf32> -> vector<16x16xf32>
    %11 = arith.addf %9, %10 : vector<16x16xf32>
    %12 = arith.index_cast %c0_i32 : i32 to index
    %c0_12 = arith.constant 0 : index
    %c0_13 = arith.constant 0 : index
    %13 = vector.load %arg1[%12, %c0_12, %c0_13] : memref<4x16x16xf32, #tpu.memory_space<vmem>>, vector<1x16x16xf32>
    %14 = vector.shape_cast %13 : vector<1x16x16xf32> to vector<16x16xf32>
    %15 = arith.addf %14, %11 : vector<16x16xf32>
    %cst_14 = arith.constant 0.000000e+00 : f32
    %cst_15 = arith.constant 1.000000e+00 : f32
    %16 = vector.broadcast %cst_14 : f32 to vector<16x16xf32>
    %17 = arith.maximumf %16, %15 : vector<16x16xf32>
    %18 = vector.broadcast %cst_15 : f32 to vector<16x16xf32>
    %19 = arith.minimumf %18, %17 : vector<16x16xf32>
    %20 = arith.index_cast %c0_i32 : i32 to index
    %c0_16 = arith.constant 0 : index
    %c0_17 = arith.constant 0 : index
    %21 = vector.load %arg7[%20, %c0_16, %c0_17] : memref<4x16x16xf32, #tpu.memory_space<vmem>>, vector<1x16x16xf32>
    %22 = vector.shape_cast %21 : vector<1x16x16xf32> to vector<16x16xf32>
    %23 = vector.shape_cast %19 : vector<16x16xf32> to vector<1x16x16xf32>
    tpu.vector_store %arg7[%20, %c0_16, %c0_17], %23 {strides = array<i32>} : memref<4x16x16xf32, #tpu.memory_space<vmem>>, vector<1x16x16xf32>,
    %c1_i32 = arith.constant 1 : i32
    %24 = arith.index_cast %c1_i32 : i32 to index
    %c0_18 = arith.constant 0 : index
    %c0_19 = arith.constant 0 : index
    %25 = vector.load %arg2[%24, %c0_18, %c0_19] : memref<4x2x2xf32, #tpu.memory_space<vmem>>, vector<1x2x2xf32>
    %26 = vector.shape_cast %25 : vector<1x2x2xf32> to vector<2x2xf32>
    %cst_20 = arith.constant dense<0.000000e+00> : vector<2x16xf32>
    %27 = tpu.matmul %26, %2, %cst_20 {dimension_numbers = #tpu.dot_dimension_numbers<[1], [0], [0], [1], [0, 0, 1, 1], [], []>} : vector<2x2xf32>, vector<2x16xf32>, vector<2x16xf32> -> vector<2x16xf32>
    %cst_21 = arith.constant dense<0.000000e+00> : vector<2x16xf32>
    %28 = tpu.matmul %26, %3, %cst_21 {dimension_numbers = #tpu.dot_dimension_numbers<[1], [0], [0], [1], [0, 0, 1, 1], [], []>} : vector<2x2xf32>, vector<2x16xf32>, vector<2x16xf32> -> vector<2x16xf32>
    %cst_22 = arith.constant dense<0.000000e+00> : vector<16x16xf32>
    %29 = tpu.matmul %0, %27, %cst_22 {dimension_numbers = #tpu.dot_dimension_numbers<[1], [0], [0], [1], [0, 0, 1, 1], [], []>} : vector<16x2xf32>, vector<2x16xf32>, vector<16x16xf32> -> vector<16x16xf32>
    %cst_23 = arith.constant dense<0.000000e+00> : vector<16x16xf32>
    %30 = tpu.matmul %1, %28, %cst_23 {dimension_numbers = #tpu.dot_dimension_numbers<[1], [0], [0], [1], [0, 0, 1, 1], [], []>} : vector<16x2xf32>, vector<2x16xf32>, vector<16x16xf32> -> vector<16x16xf32>
    %31 = arith.addf %29, %30 : vector<16x16xf32>
    %32 = arith.index_cast %c1_i32 : i32 to index
    %c0_24 = arith.constant 0 : index
    %c0_25 = arith.constant 0 : index
    %33 = vector.load %arg1[%32, %c0_24, %c0_25] : memref<4x16x16xf32, #tpu.memory_space<vmem>>, vector<1x16x16xf32>
    %34 = vector.shape_cast %33 : vector<1x16x16xf32> to vector<16x16xf32>
    %35 = arith.addf %34, %31 : vector<16x16xf32>
    %cst_26 = arith.constant 0.000000e+00 : f32
    %cst_27 = arith.constant 1.000000e+00 : f32
    %36 = vector.broadcast %cst_26 : f32 to vector<16x16xf32>
    %37 = arith.maximumf %36, %35 : vector<16x16xf32>
    %38 = vector.broadcast %cst_27 : f32 to vector<16x16xf32>
    %39 = arith.minimumf %38, %37 : vector<16x16xf32>
    %40 = arith.index_cast %c1_i32 : i32 to index
    %c0_28 = arith.constant 0 : index
    %c0_29 = arith.constant 0 : index
    %41 = vector.load %arg7[%40, %c0_28, %c0_29] : memref<4x16x16xf32, #tpu.memory_space<vmem>>, vector<1x16x16xf32>
    %42 = vector.shape_cast %41 : vector<1x16x16xf32> to vector<16x16xf32>
    %43 = vector.shape_cast %39 : vector<16x16xf32> to vector<1x16x16xf32>
    tpu.vector_store %arg7[%40, %c0_28, %c0_29], %43 {strides = array<i32>} : memref<4x16x16xf32, #tpu.memory_space<vmem>>, vector<1x16x16xf32>,
    %c2_i32 = arith.constant 2 : i32
    %44 = arith.index_cast %c2_i32 : i32 to index
    %c0_30 = arith.constant 0 : index
    %c0_31 = arith.constant 0 : index
    %45 = vector.load %arg2[%44, %c0_30, %c0_31] : memref<4x2x2xf32, #tpu.memory_space<vmem>>, vector<1x2x2xf32>
    %46 = vector.shape_cast %45 : vector<1x2x2xf32> to vector<2x2xf32>
    %cst_32 = arith.constant dense<0.000000e+00> : vector<2x16xf32>
    %47 = tpu.matmul %46, %2, %cst_32 {dimension_numbers = #tpu.dot_dimension_numbers<[1], [0], [0], [1], [0, 0, 1, 1], [], []>} : vector<2x2xf32>, vector<2x16xf32>, vector<2x16xf32> -> vector<2x16xf32>
    %cst_33 = arith.constant dense<0.000000e+00> : vector<2x16xf32>
    %48 = tpu.matmul %46, %3, %cst_33 {dimension_numbers = #tpu.dot_dimension_numbers<[1], [0], [0], [1], [0, 0, 1, 1], [], []>} : vector<2x2xf32>, vector<2x16xf32>, vector<2x16xf32> -> vector<2x16xf32>
    %cst_34 = arith.constant dense<0.000000e+00> : vector<16x16xf32>
    %49 = tpu.matmul %0, %47, %cst_34 {dimension_numbers = #tpu.dot_dimension_numbers<[1], [0], [0], [1], [0, 0, 1, 1], [], []>} : vector<16x2xf32>, vector<2x16xf32>, vector<16x16xf32> -> vector<16x16xf32>
    %cst_35 = arith.constant dense<0.000000e+00> : vector<16x16xf32>
    %50 = tpu.matmul %1, %48, %cst_35 {dimension_numbers = #tpu.dot_dimension_numbers<[1], [0], [0], [1], [0, 0, 1, 1], [], []>} : vector<16x2xf32>, vector<2x16xf32>, vector<16x16xf32> -> vector<16x16xf32>
    %51 = arith.addf %49, %50 : vector<16x16xf32>
    %52 = arith.index_cast %c2_i32 : i32 to index
    %c0_36 = arith.constant 0 : index
    %c0_37 = arith.constant 0 : index
    %53 = vector.load %arg1[%52, %c0_36, %c0_37] : memref<4x16x16xf32, #tpu.memory_space<vmem>>, vector<1x16x16xf32>
    %54 = vector.shape_cast %53 : vector<1x16x16xf32> to vector<16x16xf32>
    %55 = arith.addf %54, %51 : vector<16x16xf32>
    %cst_38 = arith.constant 0.000000e+00 : f32
    %cst_39 = arith.constant 1.000000e+00 : f32
    %56 = vector.broadcast %cst_38 : f32 to vector<16x16xf32>
    %57 = arith.maximumf %56, %55 : vector<16x16xf32>
    %58 = vector.broadcast %cst_39 : f32 to vector<16x16xf32>
    %59 = arith.minimumf %58, %57 : vector<16x16xf32>
    %60 = arith.index_cast %c2_i32 : i32 to index
    %c0_40 = arith.constant 0 : index
    %c0_41 = arith.constant 0 : index
    %61 = vector.load %arg7[%60, %c0_40, %c0_41] : memref<4x16x16xf32, #tpu.memory_space<vmem>>, vector<1x16x16xf32>
    %62 = vector.shape_cast %61 : vector<1x16x16xf32> to vector<16x16xf32>
    %63 = vector.shape_cast %59 : vector<16x16xf32> to vector<1x16x16xf32>
    tpu.vector_store %arg7[%60, %c0_40, %c0_41], %63 {strides = array<i32>} : memref<4x16x16xf32, #tpu.memory_space<vmem>>, vector<1x16x16xf32>,
    %c3_i32 = arith.constant 3 : i32
    %64 = arith.index_cast %c3_i32 : i32 to index
    %c0_42 = arith.constant 0 : index
    %c0_43 = arith.constant 0 : index
    %65 = vector.load %arg2[%64, %c0_42, %c0_43] : memref<4x2x2xf32, #tpu.memory_space<vmem>>, vector<1x2x2xf32>
    %66 = vector.shape_cast %65 : vector<1x2x2xf32> to vector<2x2xf32>
    %cst_44 = arith.constant dense<0.000000e+00> : vector<2x16xf32>
    %67 = tpu.matmul %66, %2, %cst_44 {dimension_numbers = #tpu.dot_dimension_numbers<[1], [0], [0], [1], [0, 0, 1, 1], [], []>} : vector<2x2xf32>, vector<2x16xf32>, vector<2x16xf32> -> vector<2x16xf32>
    %cst_45 = arith.constant dense<0.000000e+00> : vector<2x16xf32>
    %68 = tpu.matmul %66, %3, %cst_45 {dimension_numbers = #tpu.dot_dimension_numbers<[1], [0], [0], [1], [0, 0, 1, 1], [], []>} : vector<2x2xf32>, vector<2x16xf32>, vector<2x16xf32> -> vector<2x16xf32>
    %cst_46 = arith.constant dense<0.000000e+00> : vector<16x16xf32>
    %69 = tpu.matmul %0, %67, %cst_46 {dimension_numbers = #tpu.dot_dimension_numbers<[1], [0], [0], [1], [0, 0, 1, 1], [], []>} : vector<16x2xf32>, vector<2x16xf32>, vector<16x16xf32> -> vector<16x16xf32>
    %cst_47 = arith.constant dense<0.000000e+00> : vector<16x16xf32>
    %70 = tpu.matmul %1, %68, %cst_47 {dimension_numbers = #tpu.dot_dimension_numbers<[1], [0], [0], [1], [0, 0, 1, 1], [], []>} : vector<16x2xf32>, vector<2x16xf32>, vector<16x16xf32> -> vector<16x16xf32>
    %71 = arith.addf %69, %70 : vector<16x16xf32>
    %72 = arith.index_cast %c3_i32 : i32 to index
    %c0_48 = arith.constant 0 : index
    %c0_49 = arith.constant 0 : index
    %73 = vector.load %arg1[%72, %c0_48, %c0_49] : memref<4x16x16xf32, #tpu.memory_space<vmem>>, vector<1x16x16xf32>
    %74 = vector.shape_cast %73 : vector<1x16x16xf32> to vector<16x16xf32>
    %75 = arith.addf %74, %71 : vector<16x16xf32>
    %cst_50 = arith.constant 0.000000e+00 : f32
    %cst_51 = arith.constant 1.000000e+00 : f32
    %76 = vector.broadcast %cst_50 : f32 to vector<16x16xf32>
    %77 = arith.maximumf %76, %75 : vector<16x16xf32>
    %78 = vector.broadcast %cst_51 : f32 to vector<16x16xf32>
    %79 = arith.minimumf %78, %77 : vector<16x16xf32>
    %80 = arith.index_cast %c3_i32 : i32 to index
    %c0_52 = arith.constant 0 : index
    %c0_53 = arith.constant 0 : index
    %81 = vector.load %arg7[%80, %c0_52, %c0_53] : memref<4x16x16xf32, #tpu.memory_space<vmem>>, vector<1x16x16xf32>
    %82 = vector.shape_cast %81 : vector<1x16x16xf32> to vector<16x16xf32>
    %83 = vector.shape_cast %79 : vector<16x16xf32> to vector<1x16x16xf32>
    tpu.vector_store %arg7[%80, %c0_52, %c0_53], %83 {strides = array<i32>} : memref<4x16x16xf32, #tpu.memory_space<vmem>>, vector<1x16x16xf32>,
    %c4_i32 = arith.constant 4 : i32
    return
  }
  func.func @transform_0(%arg0: i32) -> (i32, i32, i32) {
    %c0_i32 = arith.constant 0 : i32
    %c0_i32_0 = arith.constant 0 : i32
    %c0_i32_1 = arith.constant 0 : i32
    return %arg0, %c0_i32, %c0_i32_0 : i32, i32, i32
  }
  func.func @transform_1(%arg0: i32) -> (i32, i32, i32) {
    %c0_i32 = arith.constant 0 : i32
    %c0_i32_0 = arith.constant 0 : i32
    %c0_i32_1 = arith.constant 0 : i32
    return %arg0, %c0_i32, %c0_i32_0 : i32, i32, i32
  }
  func.func @transform_2(%arg0: i32) -> (i32, i32) {
    %c0_i32 = arith.constant 0 : i32
    %c0_i32_0 = arith.constant 0 : i32
    %c0_i32_1 = arith.constant 0 : i32
    return %c0_i32, %c0_i32_0 : i32, i32
  }
  func.func @transform_3(%arg0: i32) -> (i32, i32) {
    %c0_i32 = arith.constant 0 : i32
    %c0_i32_0 = arith.constant 0 : i32
    %c0_i32_1 = arith.constant 0 : i32
    return %c0_i32, %c0_i32_0 : i32, i32
  }
  func.func @transform_4(%arg0: i32) -> (i32, i32) {
    %c0_i32 = arith.constant 0 : i32
    %c0_i32_0 = arith.constant 0 : i32
    %c0_i32_1 = arith.constant 0 : i32
    return %c0_i32, %c0_i32_0 : i32, i32
  }
  func.func @transform_5(%arg0: i32) -> (i32, i32) {
    %c0_i32 = arith.constant 0 : i32
    %c0_i32_0 = arith.constant 0 : i32
    %c0_i32_1 = arith.constant 0 : i32
    return %c0_i32, %c0_i32_0 : i32, i32
  }
  func.func @transform_6(%arg0: i32) -> (i32, i32, i32) {
    %c0_i32 = arith.constant 0 : i32
    %c0_i32_0 = arith.constant 0 : i32
    %c0_i32_1 = arith.constant 0 : i32
    return %arg0, %c0_i32, %c0_i32_0 : i32, i32, i32
  }
}

</mosaic_0001>

<llo_original>
// kernel: tpu_custom_call.1
$region0: #{tpu_custom_call.1}
  #allocation0 [shape = 'u32[]', space=smem, size = 0x4, offset = 0x4, fixed_abs, tag = 'smem constant byte address 0x4 - core index']
  #allocation1 [shape = 'u32[144,128]{1,0:T(1,128)}', space=vmem, size = 0x12000, scoped, tag = 'internal scratch']
  %s0 = inlined_call_operand.hbm [shape: f32[8,16,16], index: 0, kind: input, shape index: {}]
  %s1 = inlined_call_operand.vmem [shape: f32[8,2,2], index: 1, kind: input, shape index: {}]
  %s2 = inlined_call_operand.vmem [shape: f32[16,2], index: 2, kind: input, shape index: {}]
  %s3 = inlined_call_operand.vmem [shape: f32[16,2], index: 3, kind: input, shape index: {}]
  %s4 = inlined_call_operand.vmem [shape: f32[2,16], index: 4, kind: input, shape index: {}]
  %s5 = inlined_call_operand.vmem [shape: f32[2,16], index: 5, kind: input, shape index: {}]
  %s6 = inlined_call_operand.hbm [shape: f32[8,16,16], index: 6, kind: output, shape index: {}]
  %s7 = sld [smem:[#allocation0]]
  $region61: #{tpu_custom_call.1} parent=0
    _
  %s9 = ssub.s32 1, %s7
  %s10 = scalar_select 0, %s9, %s7
  $region1: #{tpu_custom_call.1} parent=0
    #allocation2 [shape = 'u8[65536]{0}', space=vmem, size = 0x10000, scoped, tag = 'input window, operand 0']
    #allocation3 [shape = 's32[2]{0}', space=sflag, size = 0x8, scoped, tag = 'scoped memory for tpu_custom_call.1']
    #allocation4 [shape = 's32[2]{0}', space=sflag, size = 0x8, scoped, tag = 'scoped memory for tpu_custom_call.1']
    #allocation5 [shape = 'u8[65536]{0}', space=vmem, size = 0x10000, scoped, tag = 'output window, operand 0']
    %11 = vsyncpa [#allocation3], 0
    %s12 = scalar_lea.sflag [#allocation3], 1
    %13 = vsyncpa %s12, 0
    %14 = vsyncpa [#allocation4], 0
    %s15 = scalar_lea.sflag [#allocation4], 1
    %16 = vsyncpa %s15, 0
    loop: start=0, step=1, limit=4
    $region2: #{tpu_custom_call.1} parent=1 // loop_pre_header
      _
    $region3: #{tpu_custom_call.1} parent=1 // loop_header
      %s18 = sphi 0, %s22
      %p19 = scmp.ge.s32.totalorder %s18, 4
      %s28 = sphi 0, %s30
      %s31 = sphi 0, %s28
      %s32 = sphi 0, %s31
      %s48 = sphi 0, %s32
      %s54 = sphi 0, %s56
      %s57 = sphi 0, %s54
      %s58 = sphi 0, %s57
      %s74 = sphi 0, %s58
      %s78 = sphi 0, %s78
      %s80 = sphi 0, %s78
      %s81 = sphi 0, %s80
      %s95 = sphi 0, %s81
      %s99 = sphi 0, %s99
      %s101 = sphi 0, %s99
      %s102 = sphi 0, %s101
      %s116 = sphi 0, %s102
      %s120 = sphi 0, %s120
      %s122 = sphi 0, %s120
      %s123 = sphi 0, %s122
      %s137 = sphi 0, %s123
      %s141 = sphi 0, %s141
      %s143 = sphi 0, %s141
      %s144 = sphi 0, %s143
      %s158 = sphi 0, %s144
      %s164 = sphi 0, %s166
      %s167 = sphi 0, %s164
      %s168 = sphi 0, %s167
      %s184 = sphi 0, %s168
    $region4: #{tpu_custom_call.1} parent=1 // loop_header_branch
      %21 = sbr.rel (%p19) target = $region8
    $region5: #{tpu_custom_call.1} parent=1 // loop_body
      %s23 = ssub.s32 %s18, 1
      %s24 = ssub.s32 %s18, 2
      %s25 = sadd.s32 %s18, 1
      %s26 = ssub.s32 %s18, %s25
      %p27 = scmp.eq.s32.totalorder %s26, 0
      %s29 = sadd.s32 %s28, 1
      %s30 = scalar_select %p27, %s28, %s29
      %p33 = pneg %p27
      %p34 = scmp.eq.s32.totalorder %s18, 1
      %p35 = por %p33, %p34
      %p36 = scmp.ne.s32.totalorder %s28, %s31
      %p37 = scmp.eq.s32.totalorder %s18, 0
      %p38 = por %p36, %p37
      %p39 = scmp.ne.s32.totalorder %s28, %s31
      %p40 = scmp.eq.s32.totalorder %s23, 1
      %p41 = por %p39, %p40
      %p42 = scmp.ne.s32.totalorder %s31, %s32
      %p43 = scmp.eq.s32.totalorder %s23, 0
      %p44 = por %p42, %p43
      %p45 = scmp.ne.s32.totalorder %s31, %s32
      %p46 = scmp.eq.s32.totalorder %s24, 1
      %p47 = por %p45, %p46
      %p49 = scmp.ne.s32.totalorder %s32, %s48
      %p50 = scmp.eq.s32.totalorder %s24, 0
      %p51 = por %p49, %p50
      %s52 = ssub.s32 %s18, %s25
      %p53 = scmp.eq.s32.totalorder %s52, 0
      %s55 = sadd.s32 %s54, 1
      %s56 = scalar_select %p53, %s54, %s55
      %p59 = pneg %p53
      %p60 = scmp.eq.s32.totalorder %s18, 1
      %p61 = por %p59, %p60
      %p62 = scmp.ne.s32.totalorder %s54, %s57
      %p63 = scmp.eq.s32.totalorder %s18, 0
      %p64 = por %p62, %p63
      %p65 = scmp.ne.s32.totalorder %s54, %s57
      %p66 = scmp.eq.s32.totalorder %s23, 1
      %p67 = por %p65, %p66
      %p68 = scmp.ne.s32.totalorder %s57, %s58
      %p69 = scmp.eq.s32.totalorder %s23, 0
      %p70 = por %p68, %p69
      %p71 = scmp.ne.s32.totalorder %s57, %s58
      %p72 = scmp.eq.s32.totalorder %s24, 1
      %p73 = por %p71, %p72
      %p75 = scmp.ne.s32.totalorder %s58, %s74
      %p76 = scmp.eq.s32.totalorder %s24, 0
      %p77 = por %p75, %p76
      %s79 = sadd.s32 %s78, 1
      %p82 = scmp.eq.s32.totalorder %s18, 1
      %p83 = scmp.ne.s32.totalorder %s78, %s80
      %p84 = scmp.eq.s32.totalorder %s18, 0
      %p85 = por %p83, %p84
      %p86 = scmp.ne.s32.totalorder %s78, %s80
      %p87 = scmp.eq.s32.totalorder %s23, 1
      %p88 = por %p86, %p87
      %p89 = scmp.ne.s32.totalorder %s80, %s81
      %p90 = scmp.eq.s32.totalorder %s23, 0
      %p91 = por %p89, %p90
      %p92 = scmp.ne.s32.totalorder %s80, %s81
      %p93 = scmp.eq.s32.totalorder %s24, 1
      %p94 = por %p92, %p93
      %p96 = scmp.ne.s32.totalorder %s81, %s95
      %p97 = scmp.eq.s32.totalorder %s24, 0
      %p98 = por %p96, %p97
      %s100 = sadd.s32 %s99, 1
      %p103 = scmp.eq.s32.totalorder %s18, 1
      %p104 = scmp.ne.s32.totalorder %s99, %s101
      %p105 = scmp.eq.s32.totalorder %s18, 0
      %p106 = por %p104, %p105
      %p107 = scmp.ne.s32.totalorder %s99, %s101
      %p108 = scmp.eq.s32.totalorder %s23, 1
      %p109 = por %p107, %p108
      %p110 = scmp.ne.s32.totalorder %s101, %s102
      %p111 = scmp.eq.s32.totalorder %s23, 0
      %p112 = por %p110, %p111
      %p113 = scmp.ne.s32.totalorder %s101, %s102
      %p114 = scmp.eq.s32.totalorder %s24, 1
      %p115 = por %p113, %p114
      %p117 = scmp.ne.s32.totalorder %s102, %s116
      %p118 = scmp.eq.s32.totalorder %s24, 0
      %p119 = por %p117, %p118
      %s121 = sadd.s32 %s120, 1
      %p124 = scmp.eq.s32.totalorder %s18, 1
      %p125 = scmp.ne.s32.totalorder %s120, %s122
      %p126 = scmp.eq.s32.totalorder %s18, 0
      %p127 = por %p125, %p126
      %p128 = scmp.ne.s32.totalorder %s120, %s122
      %p129 = scmp.eq.s32.totalorder %s23, 1
      %p130 = por %p128, %p129
      %p131 = scmp.ne.s32.totalorder %s122, %s123
      %p132 = scmp.eq.s32.totalorder %s23, 0
      %p133 = por %p131, %p132
      %p134 = scmp.ne.s32.totalorder %s122, %s123
      %p135 = scmp.eq.s32.totalorder %s24, 1
      %p136 = por %p134, %p135
      %p138 = scmp.ne.s32.totalorder %s123, %s137
      %p139 = scmp.eq.s32.totalorder %s24, 0
      %p140 = por %p138, %p139
      %s142 = sadd.s32 %s141, 1
      %p145 = scmp.eq.s32.totalorder %s18, 1
      %p146 = scmp.ne.s32.totalorder %s141, %s143
      %p147 = scmp.eq.s32.totalorder %s18, 0
      %p148 = por %p146, %p147
      %p149 = scmp.ne.s32.totalorder %s141, %s143
      %p150 = scmp.eq.s32.totalorder %s23, 1
      %p151 = por %p149, %p150
      %p152 = scmp.ne.s32.totalorder %s143, %s144
      %p153 = scmp.eq.s32.totalorder %s23, 0
      %p154 = por %p152, %p153
      %p155 = scmp.ne.s32.totalorder %s143, %s144
      %p156 = scmp.eq.s32.totalorder %s24, 1
      %p157 = por %p155, %p156
      %p159 = scmp.ne.s32.totalorder %s144, %s158
      %p160 = scmp.eq.s32.totalorder %s24, 0
      %p161 = por %p159, %p160
      %s162 = ssub.s32 %s18, %s25
      %p163 = scmp.eq.s32.totalorder %s162, 0
      %s165 = sadd.s32 %s164, 1
      %s166 = scalar_select %p163, %s164, %s165
      %p169 = pneg %p163
      %p170 = scmp.eq.s32.totalorder %s18, 1
      %p171 = por %p169, %p170
      %p172 = scmp.ne.s32.totalorder %s164, %s167
      %p173 = scmp.eq.s32.totalorder %s18, 0
      %p174 = por %p172, %p173
      %p175 = scmp.ne.s32.totalorder %s164, %s167
      %p176 = scmp.eq.s32.totalorder %s23, 1
      %p177 = por %p175, %p176
      %p178 = scmp.ne.s32.totalorder %s167, %s168
      %p179 = scmp.eq.s32.totalorder %s23, 0
      %p180 = por %p178, %p179
      %p181 = scmp.ne.s32.totalorder %s167, %s168
      %p182 = scmp.eq.s32.totalorder %s24, 1
      %p183 = por %p181, %p182
      %p185 = scmp.ne.s32.totalorder %s168, %s184
      %p186 = scmp.eq.s32.totalorder %s24, 0
      %p187 = por %p185, %p186
      %p188 = scmp.le.s32.totalorder 1, %s18
      %p189 = scmp.lt.s32.totalorder %s18, 3
      %p190 = pnand %p188, %p189
      %p191 = pneg %p190
      // Predicated region
      $region9: #{tpu_custom_call.1} parent=5 // pred_check
        _
      $region10: #{tpu_custom_call.1} parent=5 // pred_check_branch
        %193 = sbr.rel (%p190) target = $region12
      $region11: #{tpu_custom_call.1} parent=5 // pred_region
        %s194 = ssub.s32 %s18, 1
        // Predicated region
        $region13: #{tpu_custom_call.1} parent=11 // pred_check
          %p195 = pneg %p91
        $region14: #{tpu_custom_call.1} parent=11 // pred_check_branch
          %197 = sbr.rel (%p195) target = $region16
        $region15: #{tpu_custom_call.1} parent=11 // pred_region
          _
        $region16: #{tpu_custom_call.1} parent=11 // pred_fallthru
          _
        // Predicated region
        $region17: #{tpu_custom_call.1} parent=11 // pred_check
          %p198 = pneg %p112
        $region18: #{tpu_custom_call.1} parent=11 // pred_check_branch
          %200 = sbr.rel (%p198) target = $region20
        $region19: #{tpu_custom_call.1} parent=11 // pred_region
          _
        $region20: #{tpu_custom_call.1} parent=11 // pred_fallthru
          _
        // Predicated region
        $region21: #{tpu_custom_call.1} parent=11 // pred_check
          %p201 = pneg %p133
        $region22: #{tpu_custom_call.1} parent=11 // pred_check_branch
          %203 = sbr.rel (%p201) target = $region24
        $region23: #{tpu_custom_call.1} parent=11 // pred_region
          _
        $region24: #{tpu_custom_call.1} parent=11 // pred_fallthru
          _
        // Predicated region
        $region25: #{tpu_custom_call.1} parent=11 // pred_check
          %p204 = pneg %p154
        $region26: #{tpu_custom_call.1} parent=11 // pred_check_branch
          %206 = sbr.rel (%p204) target = $region28
        $region27: #{tpu_custom_call.1} parent=11 // pred_region
          _
        $region28: #{tpu_custom_call.1} parent=11 // pred_fallthru
          _
      $region12: #{tpu_custom_call.1} parent=5 // pred_fallthru
        _
      %p207 = scmp.lt.s32.totalorder %s18, 2
      // Predicated region
      $region29: #{tpu_custom_call.1} parent=5 // pred_check
        %p208 = pneg %p207
      $region30: #{tpu_custom_call.1} parent=5 // pred_check_branch
        %210 = sbr.rel (%p208) target = $region32
      $region31: #{tpu_custom_call.1} parent=5 // pred_region
        // Predicated region
        $region33: #{tpu_custom_call.1} parent=31 // pred_check
          %p211 = pneg %p38
        $region34: #{tpu_custom_call.1} parent=31 // pred_check_branch
          %213 = sbr.rel (%p211) target = $region36
        $region35: #{tpu_custom_call.1} parent=31 // pred_region
          %s214 = sand.u32 %s28, 1
          %s215 = scalar_lea.sflag [#allocation3], %s214
          %s216 = sand.u32 %s28, 1
          %s217 = smul.addr %s216, 64
          %s218 = scalar_lea.vmem [#allocation2], %s217
          %s219 = smul.u32 4, %s18
          %s221 = ssub.s32 1024, 1024
          %222 = vsyncadd %s215, %s221
          %s223 = smul.addr %s219, 2
          %s224 = smul.addr %s223, 128
          %s225 = scalar_lea.hbm %s0, %s224
          %s226 = sshll.u32 %s218, 4
          %s227 = int_to_ptr.vmem [resolvable:$true] %s226
          %232 = dma.hbm_to_vmem [thread:$0]  %s225, 1024, %s227, %s215, 128, 128, 8
        $region36: #{tpu_custom_call.1} parent=31 // pred_fallthru
          _
        // Predicated region
        $region37: #{tpu_custom_call.1} parent=31 // pred_check
          %p233 = pneg %p64
        $region38: #{tpu_custom_call.1} parent=31 // pred_check_branch
          %235 = sbr.rel (%p233) target = $region40
        $region39: #{tpu_custom_call.1} parent=31 // pred_region
          %s236 = smul.u32 4, %s18
          %p237 = scmp.lt.s32.totalorder %s236, 7
          %s238 = scalar_select %p237, %s236, 7
          %s239 = smul.addr %s238, 2
          %s240 = scalar_lea.vmem %s1, %s239
          %s241 = smul.u32 4, %s18
        $region40: #{tpu_custom_call.1} parent=31 // pred_fallthru
          _
      $region32: #{tpu_custom_call.1} parent=5 // pred_fallthru
        _
      %p242 = scmp.le.s32.totalorder 1, %s18
      %p243 = scmp.lt.s32.totalorder %s18, 3
      %p244 = pnand %p242, %p243
      %p245 = pneg %p244
      // Predicated region
      $region41: #{tpu_custom_call.1} parent=5 // pred_check
        _
      $region42: #{tpu_custom_call.1} parent=5 // pred_check_branch
        %247 = sbr.rel (%p244) target = $region44
      $region43: #{tpu_custom_call.1} parent=5 // pred_region
        %s248 = ssub.s32 %s18, 1
        %s249 = sand.u32 %s31, 1
        %s250 = scalar_lea.sflag [#allocation3], %s249
        %s251 = sand.u32 %s31, 1
        %s252 = smul.addr %s251, 64
        %s253 = scalar_lea.vmem [#allocation2], %s252
        // Predicated region
        $region45: #{tpu_custom_call.1} parent=43 // pred_check
          %p254 = pneg %p44
        $region46: #{tpu_custom_call.1} parent=43 // pred_check_branch
          %256 = sbr.rel (%p254) target = $region48
        $region47: #{tpu_custom_call.1} parent=43 // pred_region
          %257 = dma.done %s250, 1024
        $region48: #{tpu_custom_call.1} parent=43 // pred_fallthru
          _
        %s258 = sand.u32 %s31, 1
        %s259 = scalar_lea.sflag [#allocation3], %s258
        %s260 = sand.u32 %s31, 1
        %s261 = smul.addr %s260, 64
        %s262 = scalar_lea.vmem [#allocation2], %s261
        %p263 = pneg %p44
        %p264 = pneg %p41
        %s265 = smul.u32 4, %s23
        %p266 = scmp.lt.s32.totalorder %s265, 7
        %s267 = scalar_select %p266, %s265, 7
        %s268 = smul.addr %s267, 2
        %s269 = scalar_lea.vmem %s1, %s268
        %p270 = pneg %p70
        %p271 = pneg %p67
        %p272 = pneg %p91
        %p273 = pneg %p88
        %p274 = pneg %p112
        %p275 = pneg %p109
        %p276 = pneg %p133
        %p277 = pneg %p130
        %p278 = pneg %p154
        %p279 = pneg %p151
        %p280 = pneg %p180
        %p281 = pneg %p177
        %s282 = sand.u32 %s167, 1
        %s283 = scalar_lea.sflag [#allocation4], %s282
        %s284 = sand.u32 %s167, 1
        %s285 = smul.addr %s284, 64
        %s286 = scalar_lea.vmem [#allocation5], %s285
        %s287 = smul.u32 4, %s23
        %s288 = smul.u32 4, %s23
        %p289 = scmp.lt.s32.totalorder %s288, 7
        %s290 = scalar_select %p289, %s288, 7
        %s291 = smul.addr %s290, 2
        %s292 = scalar_lea.vmem %s1, %s291
        %s293 = smul.u32 4, %s23
        %s294 = smul.u32 4, %s23
        %v295 = vld [vmem:[%s2] sm:$0xff]
        %v296 = vld [vmem:[%s2 + $0x8] sm:$0xff]
        %v297 = vld [vmem:[%s3] sm:$0xff]
        %v298 = vld [vmem:[%s3 + $0x8] sm:$0xff]
        %v299 = vld [vmem:[%s4] sm:$0x3]
        %v300 = vld [vmem:[%s5] sm:$0x3]
        %v301 = vld [vmem:[%s292] sm:$0x3]
        %vm302 = vcmask 15360
        %v304 = vsel %vm302, %v301, 0
        %vm306 = vcmask 1041408
        %v308 = vsel %vm306, %v299, 0
        %310 = vmatprep.subr.mxu0 0.0
        %311 = vmatpush1.msra.mxu0 0.0
        %312 = vmatprep.subr.mxu0 0.0
        %313 = vmatpush1.msra.mxu0 0.0
        %314 = vmatprep.subr.mxu0 0.0
        %315 = vmatpush1.msra.mxu0 0.0
        %316 = vmatprep.subr.mxu0 0.0
        %317 = vmatpush1.msra.mxu0 0.0
        %318 = vmatprep.subr.mxu0 0.0
        %319 = vmatpush1.msra.mxu0 0.0
        %320 = vmatprep.subr.mxu0 0.0
        %321 = vmatpush1.msra.mxu0 0.0
        %322 = vmatprep.subr.mxu0 0.0
        %323 = vmatpush1.msra.mxu0 0.0
        %324 = vmatprep.subr.mxu0 0.0
        %325 = vmatpush1.msra.mxu0 0.0
        %326 = vmatprep.subr.mxu0 0.0
        %327 = vmatpush1.msra.mxu0 0.0
        %328 = vmatprep.subr.mxu0 0.0
        %329 = vmatpush1.msra.mxu0 0.0
        %330 = vmatprep.subr.mxu0 0.0
        %331 = vmatpush1.msra.mxu0 0.0
        %332 = vmatprep.subr.mxu0 0.0
        %333 = vmatpush1.msra.mxu0 0.0
        %334 = vmatprep.subr.mxu0 0.0
        %335 = vmatpush1.msra.mxu0 0.0
        %336 = vmatprep.subr.mxu0 0.0
        %337 = vmatpush1.msra.mxu0 0.0
        %338 = vmatprep.subr.mxu0 0.0
        %339 = vmatpush1.msra.mxu0 0.0
        %340 = vmatprep.subr.mxu0 0.0
        %341 = vmatpush1.msra.mxu0 %v308
        %342 = vmatprep.subr.mxu0 0.0
        %343 = vmatpush2.msra.mxu0 0.0
        %344 = vmatprep.subr.mxu0 0.0
        %345 = vmatpush2.msra.mxu0 0.0
        %346 = vmatprep.subr.mxu0 0.0
        %347 = vmatpush2.msra.mxu0 0.0
        %348 = vmatprep.subr.mxu0 0.0
        %349 = vmatpush2.msra.mxu0 0.0
        %350 = vmatprep.subr.mxu0 0.0
        %351 = vmatpush2.msra.mxu0 0.0
        %352 = vmatprep.subr.mxu0 0.0
        %353 = vmatpush2.msra.mxu0 0.0
        %354 = vmatprep.subr.mxu0 0.0
        %355 = vmatpush2.msra.mxu0 0.0
        %356 = vmatprep.subr.mxu0 0.0
        %357 = vmatpush2.msra.mxu0 0.0
        %358 = vmatprep.subr.mxu0 0.0
        %359 = vmatpush2.msra.mxu0 0.0
        %360 = vmatprep.subr.mxu0 0.0
        %361 = vmatpush2.msra.mxu0 0.0
        %362 = vmatprep.subr.mxu0 0.0
        %363 = vmatpush2.msra.mxu0 0.0
        %364 = vmatprep.subr.mxu0 0.0
        %365 = vmatpush2.msra.mxu0 0.0
        %366 = vmatprep.subr.mxu0 0.0
        %367 = vmatpush2.msra.mxu0 0.0
        %368 = vmatprep.subr.mxu0 0.0
        %369 = vmatpush2.msra.mxu0 0.0
        %370 = vmatprep.subr.mxu0 0.0
        %371 = vmatpush2.msra.mxu0 0.0
        %372 = vmatprep.subr.mxu0 0.0
        %373 = vmatpush2.msra.mxu0 0.0
        %374 = vmatprep.mubr.f32.mxu0 0.0
        %375 = vmatmul.mubr.f32.gmra.mxu0 %v304
        %v376 = vpop.f32.mrf.mxu0
        %v377 = vadd.f32 0.0, %v376
        %v378 = vpop.f32.mrf.mxu0
        %379 = vdwg.mxu0
        %v381 = vsel %vm306, %v300, 0
        %383 = vmatprep.subr.mxu0 0.0
        %384 = vmatpush1.msra.mxu0 0.0
        %385 = vmatprep.subr.mxu0 0.0
        %386 = vmatpush1.msra.mxu0 0.0
        %387 = vmatprep.subr.mxu0 0.0
        %388 = vmatpush1.msra.mxu0 0.0
        %389 = vmatprep.subr.mxu0 0.0
        %390 = vmatpush1.msra.mxu0 0.0
        %391 = vmatprep.subr.mxu0 0.0
        %392 = vmatpush1.msra.mxu0 0.0
        %393 = vmatprep.subr.mxu0 0.0
        %394 = vmatpush1.msra.mxu0 0.0
        %395 = vmatprep.subr.mxu0 0.0
        %396 = vmatpush1.msra.mxu0 0.0
        %397 = vmatprep.subr.mxu0 0.0
        %398 = vmatpush1.msra.mxu0 0.0
        %399 = vmatprep.subr.mxu0 0.0
        %400 = vmatpush1.msra.mxu0 0.0
        %401 = vmatprep.subr.mxu0 0.0
        %402 = vmatpush1.msra.mxu0 0.0
        %403 = vmatprep.subr.mxu0 0.0
        %404 = vmatpush1.msra.mxu0 0.0
        %405 = vmatprep.subr.mxu0 0.0
        %406 = vmatpush1.msra.mxu0 0.0
        %407 = vmatprep.subr.mxu0 0.0
        %408 = vmatpush1.msra.mxu0 0.0
        %409 = vmatprep.subr.mxu0 0.0
        %410 = vmatpush1.msra.mxu0 0.0
        %411 = vmatprep.subr.mxu0 0.0
        %412 = vmatpush1.msra.mxu0 0.0
        %413 = vmatprep.subr.mxu0 0.0
        %414 = vmatpush1.msra.mxu0 %v381
        %415 = vmatprep.subr.mxu0 0.0
        %416 = vmatpush2.msra.mxu0 0.0
        %417 = vmatprep.subr.mxu0 0.0
        %418 = vmatpush2.msra.mxu0 0.0
        %419 = vmatprep.subr.mxu0 0.0
        %420 = vmatpush2.msra.mxu0 0.0
        %421 = vmatprep.subr.mxu0 0.0
        %422 = vmatpush2.msra.mxu0 0.0
        %423 = vmatprep.subr.mxu0 0.0
        %424 = vmatpush2.msra.mxu0 0.0
        %425 = vmatprep.subr.mxu0 0.0
        %426 = vmatpush2.msra.mxu0 0.0
        %427 = vmatprep.subr.mxu0 0.0
        %428 = vmatpush2.msra.mxu0 0.0
        %429 = vmatprep.subr.mxu0 0.0
        %430 = vmatpush2.msra.mxu0 0.0
        %431 = vmatprep.subr.mxu0 0.0
        %432 = vmatpush2.msra.mxu0 0.0
        %433 = vmatprep.subr.mxu0 0.0
        %434 = vmatpush2.msra.mxu0 0.0
        %435 = vmatprep.subr.mxu0 0.0
        %436 = vmatpush2.msra.mxu0 0.0
        %437 = vmatprep.subr.mxu0 0.0
        %438 = vmatpush2.msra.mxu0 0.0
        %439 = vmatprep.subr.mxu0 0.0
        %440 = vmatpush2.msra.mxu0 0.0
        %441 = vmatprep.subr.mxu0 0.0
        %442 = vmatpush2.msra.mxu0 0.0
        %443 = vmatprep.subr.mxu0 0.0
        %444 = vmatpush2.msra.mxu0 0.0
        %445 = vmatprep.subr.mxu0 0.0
        %446 = vmatpush2.msra.mxu0 0.0
        %447 = vmatprep.mubr.f32.mxu0 0.0
        %448 = vmatmul.mubr.f32.gmra.mxu0 %v304
        %v449 = vpop.f32.mrf.mxu0
        %v450 = vadd.f32 0.0, %v449
        %v451 = vpop.f32.mrf.mxu0
        %452 = vdwg.mxu0
        %v454 = vsel %vm302, %v297, 0
        %v457 = vsel %vm302, %v298, 0
        %v460 = vsel %vm306, %v450, 0
        %462 = vmatprep.subr.mxu0 0.0
        %463 = vmatpush1.msra.mxu0 0.0
        %464 = vmatprep.subr.mxu0 0.0
        %465 = vmatpush1.msra.mxu0 0.0
        %466 = vmatprep.subr.mxu0 0.0
        %467 = vmatpush1.msra.mxu0 0.0
        %468 = vmatprep.subr.mxu0 0.0
        %469 = vmatpush1.msra.mxu0 0.0
        %470 = vmatprep.subr.mxu0 0.0
        %471 = vmatpush1.msra.mxu0 0.0
        %472 = vmatprep.subr.mxu0 0.0
        %473 = vmatpush1.msra.mxu0 0.0
        %474 = vmatprep.subr.mxu0 0.0
        %475 = vmatpush1.msra.mxu0 0.0
        %476 = vmatprep.subr.mxu0 0.0
        %477 = vmatpush1.msra.mxu0 0.0
        %478 = vmatprep.subr.mxu0 0.0
        %479 = vmatpush1.msra.mxu0 0.0
        %480 = vmatprep.subr.mxu0 0.0
        %481 = vmatpush1.msra.mxu0 0.0
        %482 = vmatprep.subr.mxu0 0.0
        %483 = vmatpush1.msra.mxu0 0.0
        %484 = vmatprep.subr.mxu0 0.0
        %485 = vmatpush1.msra.mxu0 0.0
        %486 = vmatprep.subr.mxu0 0.0
        %487 = vmatpush1.msra.mxu0 0.0
        %488 = vmatprep.subr.mxu0 0.0
        %489 = vmatpush1.msra.mxu0 0.0
        %490 = vmatprep.subr.mxu0 0.0
        %491 = vmatpush1.msra.mxu0 0.0
        %492 = vmatprep.subr.mxu0 0.0
        %493 = vmatpush1.msra.mxu0 %v460
        %494 = vmatprep.subr.mxu0 0.0
        %495 = vmatpush2.msra.mxu0 0.0
        %496 = vmatprep.subr.mxu0 0.0
        %497 = vmatpush2.msra.mxu0 0.0
        %498 = vmatprep.subr.mxu0 0.0
        %499 = vmatpush2.msra.mxu0 0.0
        %500 = vmatprep.subr.mxu0 0.0
        %501 = vmatpush2.msra.mxu0 0.0
        %502 = vmatprep.subr.mxu0 0.0
        %503 = vmatpush2.msra.mxu0 0.0
        %504 = vmatprep.subr.mxu0 0.0
        %505 = vmatpush2.msra.mxu0 0.0
        %506 = vmatprep.subr.mxu0 0.0
        %507 = vmatpush2.msra.mxu0 0.0
        %508 = vmatprep.subr.mxu0 0.0
        %509 = vmatpush2.msra.mxu0 0.0
        %510 = vmatprep.subr.mxu0 0.0
        %511 = vmatpush2.msra.mxu0 0.0
        %512 = vmatprep.subr.mxu0 0.0
        %513 = vmatpush2.msra.mxu0 0.0
        %514 = vmatprep.subr.mxu0 0.0
        %515 = vmatpush2.msra.mxu0 0.0
        %516 = vmatprep.subr.mxu0 0.0
        %517 = vmatpush2.msra.mxu0 0.0
        %518 = vmatprep.subr.mxu0 0.0
        %519 = vmatpush2.msra.mxu0 0.0
        %520 = vmatprep.subr.mxu0 0.0
        %521 = vmatpush2.msra.mxu0 0.0
        %522 = vmatprep.subr.mxu0 0.0
        %523 = vmatpush2.msra.mxu0 0.0
        %524 = vmatprep.subr.mxu0 0.0
        %525 = vmatpush2.msra.mxu0 0.0
        %526 = vmatprep.mubr.f32.mxu0 0.0
        %527 = vmatmul.mubr.f32.gmra.mxu0 %v454
        %v528 = vpop.f32.mrf.mxu0
        %v529 = vadd.f32 0.0, %v528
        %v530 = vpop.f32.mrf.mxu0
        %531 = vmatprep.mubr.f32.mxu0 0.0
        %532 = vmatmul.mubr.f32.gmra.mxu0 %v457
        %v533 = vpop.f32.mrf.mxu0
        %v534 = vadd.f32 0.0, %v533
        %v535 = vpop.f32.mrf.mxu0
        %536 = vdwg.mxu0
        %v538 = vsel %vm302, %v295, 0
        %v541 = vsel %vm302, %v296, 0
        %v544 = vsel %vm306, %v377, 0
        %546 = vmatprep.subr.mxu0 0.0
        %547 = vmatpush1.msra.mxu0 0.0
        %548 = vmatprep.subr.mxu0 0.0
        %549 = vmatpush1.msra.mxu0 0.0
        %550 = vmatprep.subr.mxu0 0.0
        %551 = vmatpush1.msra.mxu0 0.0
        %552 = vmatprep.subr.mxu0 0.0
        %553 = vmatpush1.msra.mxu0 0.0
        %554 = vmatprep.subr.mxu0 0.0
        %555 = vmatpush1.msra.mxu0 0.0
        %556 = vmatprep.subr.mxu0 0.0
        %557 = vmatpush1.msra.mxu0 0.0
        %558 = vmatprep.subr.mxu0 0.0
        %559 = vmatpush1.msra.mxu0 0.0
        %560 = vmatprep.subr.mxu0 0.0
        %561 = vmatpush1.msra.mxu0 0.0
        %562 = vmatprep.subr.mxu0 0.0
        %563 = vmatpush1.msra.mxu0 0.0
        %564 = vmatprep.subr.mxu0 0.0
        %565 = vmatpush1.msra.mxu0 0.0
        %566 = vmatprep.subr.mxu0 0.0
        %567 = vmatpush1.msra.mxu0 0.0
        %568 = vmatprep.subr.mxu0 0.0
        %569 = vmatpush1.msra.mxu0 0.0
        %570 = vmatprep.subr.mxu0 0.0
        %571 = vmatpush1.msra.mxu0 0.0
        %572 = vmatprep.subr.mxu0 0.0
        %573 = vmatpush1.msra.mxu0 0.0
        %574 = vmatprep.subr.mxu0 0.0
        %575 = vmatpush1.msra.mxu0 0.0
        %576 = vmatprep.subr.mxu0 0.0
        %577 = vmatpush1.msra.mxu0 %v544
        %578 = vmatprep.subr.mxu0 0.0
        %579 = vmatpush2.msra.mxu0 0.0
        %580 = vmatprep.subr.mxu0 0.0
        %581 = vmatpush2.msra.mxu0 0.0
        %582 = vmatprep.subr.mxu0 0.0
        %583 = vmatpush2.msra.mxu0 0.0
        %584 = vmatprep.subr.mxu0 0.0
        %585 = vmatpush2.msra.mxu0 0.0
        %586 = vmatprep.subr.mxu0 0.0
        %587 = vmatpush2.msra.mxu0 0.0
        %588 = vmatprep.subr.mxu0 0.0
        %589 = vmatpush2.msra.mxu0 0.0
        %590 = vmatprep.subr.mxu0 0.0
        %591 = vmatpush2.msra.mxu0 0.0
        %592 = vmatprep.subr.mxu0 0.0
        %593 = vmatpush2.msra.mxu0 0.0
        %594 = vmatprep.subr.mxu0 0.0
        %595 = vmatpush2.msra.mxu0 0.0
        %596 = vmatprep.subr.mxu0 0.0
        %597 = vmatpush2.msra.mxu0 0.0
        %598 = vmatprep.subr.mxu0 0.0
        %599 = vmatpush2.msra.mxu0 0.0
        %600 = vmatprep.subr.mxu0 0.0
        %601 = vmatpush2.msra.mxu0 0.0
        %602 = vmatprep.subr.mxu0 0.0
        %603 = vmatpush2.msra.mxu0 0.0
        %604 = vmatprep.subr.mxu0 0.0
        %605 = vmatpush2.msra.mxu0 0.0
        %606 = vmatprep.subr.mxu0 0.0
        %607 = vmatpush2.msra.mxu0 0.0
        %608 = vmatprep.subr.mxu0 0.0
        %609 = vmatpush2.msra.mxu0 0.0
        %610 = vmatprep.mubr.f32.mxu0 0.0
        %611 = vmatmul.mubr.f32.gmra.mxu0 %v538
        %v612 = vpop.f32.mrf.mxu0
        %v613 = vadd.f32 %v529, %v612
        %v614 = vpop.f32.mrf.mxu0
        %615 = vmatprep.mubr.f32.mxu0 0.0
        %616 = vmatmul.mubr.f32.gmra.mxu0 %v541
        %v617 = vpop.f32.mrf.mxu0
        %v618 = vadd.f32 %v534, %v617
        %v619 = vpop.f32.mrf.mxu0
        %620 = vdwg.mxu0
        %v621 = vld [vmem:[%s253] sm:$0xff]
        %v622 = vld [vmem:[%s253 + $0x8] sm:$0xff]
        %v623 = vadd.f32 %v621, %v613
        %v624 = vadd.f32 %v622, %v618
        %v625 = vmax.f32 %v623, 0.0
        %v626 = vmax.f32 %v624, 0.0
        %v627 = vmin.f32 %v625, 1.0
        %v628 = vmin.f32 %v626, 1.0
        %vm629 = vcmask 130048
        %630 = vst.msk [vmem:[%s286] sm:$0xff] %vm629, %v627
        %631 = vst.msk [vmem:[%s286 + $0x8] sm:$0xff] %vm629, %v628
        %s632 = scalar_lea.vmem %s292, 2
        %v633 = vld [vmem:[%s632] sm:$0x3]
        %v635 = vsel %vm302, %v633, 0
        %637 = vmatprep.subr.mxu0 0.0
        %638 = vmatpush1.msra.mxu0 0.0
        %639 = vmatprep.subr.mxu0 0.0
        %640 = vmatpush1.msra.mxu0 0.0
        %641 = vmatprep.subr.mxu0 0.0
        %642 = vmatpush1.msra.mxu0 0.0
        %643 = vmatprep.subr.mxu0 0.0
        %644 = vmatpush1.msra.mxu0 0.0
        %645 = vmatprep.subr.mxu0 0.0
        %646 = vmatpush1.msra.mxu0 0.0
        %647 = vmatprep.subr.mxu0 0.0
        %648 = vmatpush1.msra.mxu0 0.0
        %649 = vmatprep.subr.mxu0 0.0
        %650 = vmatpush1.msra.mxu0 0.0
        %651 = vmatprep.subr.mxu0 0.0
        %652 = vmatpush1.msra.mxu0 0.0
        %653 = vmatprep.subr.mxu0 0.0
        %654 = vmatpush1.msra.mxu0 0.0
        %655 = vmatprep.subr.mxu0 0.0
        %656 = vmatpush1.msra.mxu0 0.0
        %657 = vmatprep.subr.mxu0 0.0
        %658 = vmatpush1.msra.mxu0 0.0
        %659 = vmatprep.subr.mxu0 0.0
        %660 = vmatpush1.msra.mxu0 0.0
        %661 = vmatprep.subr.mxu0 0.0
        %662 = vmatpush1.msra.mxu0 0.0
        %663 = vmatprep.subr.mxu0 0.0
        %664 = vmatpush1.msra.mxu0 0.0
        %665 = vmatprep.subr.mxu0 0.0
        %666 = vmatpush1.msra.mxu0 0.0
        %667 = vmatprep.subr.mxu0 0.0
        %668 = vmatpush1.msra.mxu0 %v308
        %669 = vmatprep.subr.mxu0 0.0
        %670 = vmatpush2.msra.mxu0 0.0
        %671 = vmatprep.subr.mxu0 0.0
        %672 = vmatpush2.msra.mxu0 0.0
        %673 = vmatprep.subr.mxu0 0.0
        %674 = vmatpush2.msra.mxu0 0.0
        %675 = vmatprep.subr.mxu0 0.0
        %676 = vmatpush2.msra.mxu0 0.0
        %677 = vmatprep.subr.mxu0 0.0
        %678 = vmatpush2.msra.mxu0 0.0
        %679 = vmatprep.subr.mxu0 0.0
        %680 = vmatpush2.msra.mxu0 0.0
        %681 = vmatprep.subr.mxu0 0.0
        %682 = vmatpush2.msra.mxu0 0.0
        %683 = vmatprep.subr.mxu0 0.0
        %684 = vmatpush2.msra.mxu0 0.0
        %685 = vmatprep.subr.mxu0 0.0
        %686 = vmatpush2.msra.mxu0 0.0
        %687 = vmatprep.subr.mxu0 0.0
        %688 = vmatpush2.msra.mxu0 0.0
        %689 = vmatprep.subr.mxu0 0.0
        %690 = vmatpush2.msra.mxu0 0.0
        %691 = vmatprep.subr.mxu0 0.0
        %692 = vmatpush2.msra.mxu0 0.0
        %693 = vmatprep.subr.mxu0 0.0
        %694 = vmatpush2.msra.mxu0 0.0
        %695 = vmatprep.subr.mxu0 0.0
        %696 = vmatpush2.msra.mxu0 0.0
        %697 = vmatprep.subr.mxu0 0.0
        %698 = vmatpush2.msra.mxu0 0.0
        %699 = vmatprep.subr.mxu0 0.0
        %700 = vmatpush2.msra.mxu0 0.0
        %701 = vmatprep.mubr.f32.mxu0 0.0
        %702 = vmatmul.mubr.f32.gmra.mxu0 %v635
        %v703 = vpop.f32.mrf.mxu0
        %v704 = vadd.f32 0.0, %v703
        %v705 = vpop.f32.mrf.mxu0
        %706 = vdwg.mxu0
        %707 = vmatprep.subr.mxu0 0.0
        %708 = vmatpush1.msra.mxu0 0.0
        %709 = vmatprep.subr.mxu0 0.0
        %710 = vmatpush1.msra.mxu0 0.0
        %711 = vmatprep.subr.mxu0 0.0
        %712 = vmatpush1.msra.mxu0 0.0
        %713 = vmatprep.subr.mxu0 0.0
        %714 = vmatpush1.msra.mxu0 0.0
        %715 = vmatprep.subr.mxu0 0.0
        %716 = vmatpush1.msra.mxu0 0.0
        %717 = vmatprep.subr.mxu0 0.0
        %718 = vmatpush1.msra.mxu0 0.0
        %719 = vmatprep.subr.mxu0 0.0
        %720 = vmatpush1.msra.mxu0 0.0
        %721 = vmatprep.subr.mxu0 0.0
        %722 = vmatpush1.msra.mxu0 0.0
        %723 = vmatprep.subr.mxu0 0.0
        %724 = vmatpush1.msra.mxu0 0.0
        %725 = vmatprep.subr.mxu0 0.0
        %726 = vmatpush1.msra.mxu0 0.0
        %727 = vmatprep.subr.mxu0 0.0
        %728 = vmatpush1.msra.mxu0 0.0
        %729 = vmatprep.subr.mxu0 0.0
        %730 = vmatpush1.msra.mxu0 0.0
        %731 = vmatprep.subr.mxu0 0.0
        %732 = vmatpush1.msra.mxu0 0.0
        %733 = vmatprep.subr.mxu0 0.0
        %734 = vmatpush1.msra.mxu0 0.0
        %735 = vmatprep.subr.mxu0 0.0
        %736 = vmatpush1.msra.mxu0 0.0
        %737 = vmatprep.subr.mxu0 0.0
        %738 = vmatpush1.msra.mxu0 %v381
        %739 = vmatprep.subr.mxu0 0.0
        %740 = vmatpush2.msra.mxu0 0.0
        %741 = vmatprep.subr.mxu0 0.0
        %742 = vmatpush2.msra.mxu0 0.0
        %743 = vmatprep.subr.mxu0 0.0
        %744 = vmatpush2.msra.mxu0 0.0
        %745 = vmatprep.subr.mxu0 0.0
        %746 = vmatpush2.msra.mxu0 0.0
        %747 = vmatprep.subr.mxu0 0.0
        %748 = vmatpush2.msra.mxu0 0.0
        %749 = vmatprep.subr.mxu0 0.0
        %750 = vmatpush2.msra.mxu0 0.0
        %751 = vmatprep.subr.mxu0 0.0
        %752 = vmatpush2.msra.mxu0 0.0
        %753 = vmatprep.subr.mxu0 0.0
        %754 = vmatpush2.msra.mxu0 0.0
        %755 = vmatprep.subr.mxu0 0.0
        %756 = vmatpush2.msra.mxu0 0.0
        %757 = vmatprep.subr.mxu0 0.0
        %758 = vmatpush2.msra.mxu0 0.0
        %759 = vmatprep.subr.mxu0 0.0
        %760 = vmatpush2.msra.mxu0 0.0
        %761 = vmatprep.subr.mxu0 0.0
        %762 = vmatpush2.msra.mxu0 0.0
        %763 = vmatprep.subr.mxu0 0.0
        %764 = vmatpush2.msra.mxu0 0.0
        %765 = vmatprep.subr.mxu0 0.0
        %766 = vmatpush2.msra.mxu0 0.0
        %767 = vmatprep.subr.mxu0 0.0
        %768 = vmatpush2.msra.mxu0 0.0
        %769 = vmatprep.subr.mxu0 0.0
        %770 = vmatpush2.msra.mxu0 0.0
        %771 = vmatprep.mubr.f32.mxu0 0.0
        %772 = vmatmul.mubr.f32.gmra.mxu0 %v635
        %v773 = vpop.f32.mrf.mxu0
        %v774 = vadd.f32 0.0, %v773
        %v775 = vpop.f32.mrf.mxu0
        %776 = vdwg.mxu0
        %v778 = vsel %vm306, %v774, 0
        %780 = vmatprep.subr.mxu0 0.0
        %781 = vmatpush1.msra.mxu0 0.0
        %782 = vmatprep.subr.mxu0 0.0
        %783 = vmatpush1.msra.mxu0 0.0
        %784 = vmatprep.subr.mxu0 0.0
        %785 = vmatpush1.msra.mxu0 0.0
        %786 = vmatprep.subr.mxu0 0.0
        %787 = vmatpush1.msra.mxu0 0.0
        %788 = vmatprep.subr.mxu0 0.0
        %789 = vmatpush1.msra.mxu0 0.0
        %790 = vmatprep.subr.mxu0 0.0
        %791 = vmatpush1.msra.mxu0 0.0
        %792 = vmatprep.subr.mxu0 0.0
        %793 = vmatpush1.msra.mxu0 0.0
        %794 = vmatprep.subr.mxu0 0.0
        %795 = vmatpush1.msra.mxu0 0.0
        %796 = vmatprep.subr.mxu0 0.0
        %797 = vmatpush1.msra.mxu0 0.0
        %798 = vmatprep.subr.mxu0 0.0
        %799 = vmatpush1.msra.mxu0 0.0
        %800 = vmatprep.subr.mxu0 0.0
        %801 = vmatpush1.msra.mxu0 0.0
        %802 = vmatprep.subr.mxu0 0.0
        %803 = vmatpush1.msra.mxu0 0.0
        %804 = vmatprep.subr.mxu0 0.0
        %805 = vmatpush1.msra.mxu0 0.0
        %806 = vmatprep.subr.mxu0 0.0
        %807 = vmatpush1.msra.mxu0 0.0
        %808 = vmatprep.subr.mxu0 0.0
        %809 = vmatpush1.msra.mxu0 0.0
        %810 = vmatprep.subr.mxu0 0.0
        %811 = vmatpush1.msra.mxu0 %v778
        %812 = vmatprep.subr.mxu0 0.0
        %813 = vmatpush2.msra.mxu0 0.0
        %814 = vmatprep.subr.mxu0 0.0
        %815 = vmatpush2.msra.mxu0 0.0
        %816 = vmatprep.subr.mxu0 0.0
        %817 = vmatpush2.msra.mxu0 0.0
        %818 = vmatprep.subr.mxu0 0.0
        %819 = vmatpush2.msra.mxu0 0.0
        %820 = vmatprep.subr.mxu0 0.0
        %821 = vmatpush2.msra.mxu0 0.0
        %822 = vmatprep.subr.mxu0 0.0
        %823 = vmatpush2.msra.mxu0 0.0
        %824 = vmatprep.subr.mxu0 0.0
        %825 = vmatpush2.msra.mxu0 0.0
        %826 = vmatprep.subr.mxu0 0.0
        %827 = vmatpush2.msra.mxu0 0.0
        %828 = vmatprep.subr.mxu0 0.0
        %829 = vmatpush2.msra.mxu0 0.0
        %830 = vmatprep.subr.mxu0 0.0
        %831 = vmatpush2.msra.mxu0 0.0
        %832 = vmatprep.subr.mxu0 0.0
        %833 = vmatpush2.msra.mxu0 0.0
        %834 = vmatprep.subr.mxu0 0.0
        %835 = vmatpush2.msra.mxu0 0.0
        %836 = vmatprep.subr.mxu0 0.0
        %837 = vmatpush2.msra.mxu0 0.0
        %838 = vmatprep.subr.mxu0 0.0
        %839 = vmatpush2.msra.mxu0 0.0
        %840 = vmatprep.subr.mxu0 0.0
        %841 = vmatpush2.msra.mxu0 0.0
        %842 = vmatprep.subr.mxu0 0.0
        %843 = vmatpush2.msra.mxu0 0.0
        %844 = vmatprep.mubr.f32.mxu0 0.0
        %845 = vmatmul.mubr.f32.gmra.mxu0 %v454
        %v846 = vpop.f32.mrf.mxu0
        %v847 = vadd.f32 0.0, %v846
        %v848 = vpop.f32.mrf.mxu0
        %849 = vmatprep.mubr.f32.mxu0 0.0
        %850 = vmatmul.mubr.f32.gmra.mxu0 %v457
        %v851 = vpop.f32.mrf.mxu0
        %v852 = vadd.f32 0.0, %v851
        %v853 = vpop.f32.mrf.mxu0
        %854 = vdwg.mxu0
        %v856 = vsel %vm306, %v704, 0
        %858 = vmatprep.subr.mxu0 0.0
        %859 = vmatpush1.msra.mxu0 0.0
        %860 = vmatprep.subr.mxu0 0.0
        %861 = vmatpush1.msra.mxu0 0.0
        %862 = vmatprep.subr.mxu0 0.0
        %863 = vmatpush1.msra.mxu0 0.0
        %864 = vmatprep.subr.mxu0 0.0
        %865 = vmatpush1.msra.mxu0 0.0
        %866 = vmatprep.subr.mxu0 0.0
        %867 = vmatpush1.msra.mxu0 0.0
        %868 = vmatprep.subr.mxu0 0.0
        %869 = vmatpush1.msra.mxu0 0.0
        %870 = vmatprep.subr.mxu0 0.0
        %871 = vmatpush1.msra.mxu0 0.0
        %872 = vmatprep.subr.mxu0 0.0
        %873 = vmatpush1.msra.mxu0 0.0
        %874 = vmatprep.subr.mxu0 0.0
        %875 = vmatpush1.msra.mxu0 0.0
        %876 = vmatprep.subr.mxu0 0.0
        %877 = vmatpush1.msra.mxu0 0.0
        %878 = vmatprep.subr.mxu0 0.0
        %879 = vmatpush1.msra.mxu0 0.0
        %880 = vmatprep.subr.mxu0 0.0
        %881 = vmatpush1.msra.mxu0 0.0
        %882 = vmatprep.subr.mxu0 0.0
        %883 = vmatpush1.msra.mxu0 0.0
        %884 = vmatprep.subr.mxu0 0.0
        %885 = vmatpush1.msra.mxu0 0.0
        %886 = vmatprep.subr.mxu0 0.0
        %887 = vmatpush1.msra.mxu0 0.0
        %888 = vmatprep.subr.mxu0 0.0
        %889 = vmatpush1.msra.mxu0 %v856
        %890 = vmatprep.subr.mxu0 0.0
        %891 = vmatpush2.msra.mxu0 0.0
        %892 = vmatprep.subr.mxu0 0.0
        %893 = vmatpush2.msra.mxu0 0.0
        %894 = vmatprep.subr.mxu0 0.0
        %895 = vmatpush2.msra.mxu0 0.0
        %896 = vmatprep.subr.mxu0 0.0
        %897 = vmatpush2.msra.mxu0 0.0
        %898 = vmatprep.subr.mxu0 0.0
        %899 = vmatpush2.msra.mxu0 0.0
        %900 = vmatprep.subr.mxu0 0.0
        %901 = vmatpush2.msra.mxu0 0.0
        %902 = vmatprep.subr.mxu0 0.0
        %903 = vmatpush2.msra.mxu0 0.0
        %904 = vmatprep.subr.mxu0 0.0
        %905 = vmatpush2.msra.mxu0 0.0
        %906 = vmatprep.subr.mxu0 0.0
        %907 = vmatpush2.msra.mxu0 0.0
        %908 = vmatprep.subr.mxu0 0.0
        %909 = vmatpush2.msra.mxu0 0.0
        %910 = vmatprep.subr.mxu0 0.0
        %911 = vmatpush2.msra.mxu0 0.0
        %912 = vmatprep.subr.mxu0 0.0
        %913 = vmatpush2.msra.mxu0 0.0
        %914 = vmatprep.subr.mxu0 0.0
        %915 = vmatpush2.msra.mxu0 0.0
        %916 = vmatprep.subr.mxu0 0.0
        %917 = vmatpush2.msra.mxu0 0.0
        %918 = vmatprep.subr.mxu0 0.0
        %919 = vmatpush2.msra.mxu0 0.0
        %920 = vmatprep.subr.mxu0 0.0
        %921 = vmatpush2.msra.mxu0 0.0
        %922 = vmatprep.mubr.f32.mxu0 0.0
        %923 = vmatmul.mubr.f32.gmra.mxu0 %v538
        %v924 = vpop.f32.mrf.mxu0
        %v925 = vadd.f32 %v847, %v924
        %v926 = vpop.f32.mrf.mxu0
        %927 = vmatprep.mubr.f32.mxu0 0.0
        %928 = vmatmul.mubr.f32.gmra.mxu0 %v541
        %v929 = vpop.f32.mrf.mxu0
        %v930 = vadd.f32 %v852, %v929
        %v931 = vpop.f32.mrf.mxu0
        %932 = vdwg.mxu0
        %s933 = scalar_lea.vmem %s253, 16 [#allocation2]
        %v934 = vld [vmem:[%s933] sm:$0xff]
        %v935 = vld [vmem:[%s933 + $0x8] sm:$0xff]
        %v936 = vadd.f32 %v934, %v925
        %v937 = vadd.f32 %v935, %v930
        %v938 = vmax.f32 %v936, 0.0
        %v939 = vmax.f32 %v937, 0.0
        %v940 = vmin.f32 %v938, 1.0
        %v941 = vmin.f32 %v939, 1.0
        %s942 = scalar_lea.vmem %s286, 16 [#allocation5]
        %943 = vst.msk [vmem:[%s942] sm:$0xff] %vm629, %v940
        %944 = vst.msk [vmem:[%s942 + $0x8] sm:$0xff] %vm629, %v941
        %s945 = scalar_lea.vmem %s292, 4
        %v946 = vld [vmem:[%s945] sm:$0x3]
        %v948 = vsel %vm302, %v946, 0
        %950 = vmatprep.subr.mxu0 0.0
        %951 = vmatpush1.msra.mxu0 0.0
        %952 = vmatprep.subr.mxu0 0.0
        %953 = vmatpush1.msra.mxu0 0.0
        %954 = vmatprep.subr.mxu0 0.0
        %955 = vmatpush1.msra.mxu0 0.0
        %956 = vmatprep.subr.mxu0 0.0
        %957 = vmatpush1.msra.mxu0 0.0
        %958 = vmatprep.subr.mxu0 0.0
        %959 = vmatpush1.msra.mxu0 0.0
        %960 = vmatprep.subr.mxu0 0.0
        %961 = vmatpush1.msra.mxu0 0.0
        %962 = vmatprep.subr.mxu0 0.0
        %963 = vmatpush1.msra.mxu0 0.0
        %964 = vmatprep.subr.mxu0 0.0
        %965 = vmatpush1.msra.mxu0 0.0
        %966 = vmatprep.subr.mxu0 0.0
        %967 = vmatpush1.msra.mxu0 0.0
        %968 = vmatprep.subr.mxu0 0.0
        %969 = vmatpush1.msra.mxu0 0.0
        %970 = vmatprep.subr.mxu0 0.0
        %971 = vmatpush1.msra.mxu0 0.0
        %972 = vmatprep.subr.mxu0 0.0
        %973 = vmatpush1.msra.mxu0 0.0
        %974 = vmatprep.subr.mxu0 0.0
        %975 = vmatpush1.msra.mxu0 0.0
        %976 = vmatprep.subr.mxu0 0.0
        %977 = vmatpush1.msra.mxu0 0.0
        %978 = vmatprep.subr.mxu0 0.0
        %979 = vmatpush1.msra.mxu0 0.0
        %980 = vmatprep.subr.mxu0 0.0
        %981 = vmatpush1.msra.mxu0 %v308
        %982 = vmatprep.subr.mxu0 0.0
        %983 = vmatpush2.msra.mxu0 0.0
        %984 = vmatprep.subr.mxu0 0.0
        %985 = vmatpush2.msra.mxu0 0.0
        %986 = vmatprep.subr.mxu0 0.0
        %987 = vmatpush2.msra.mxu0 0.0
        %988 = vmatprep.subr.mxu0 0.0
        %989 = vmatpush2.msra.mxu0 0.0
        %990 = vmatprep.subr.mxu0 0.0
        %991 = vmatpush2.msra.mxu0 0.0
        %992 = vmatprep.subr.mxu0 0.0
        %993 = vmatpush2.msra.mxu0 0.0
        %994 = vmatprep.subr.mxu0 0.0
        %995 = vmatpush2.msra.mxu0 0.0
        %996 = vmatprep.subr.mxu0 0.0
        %997 = vmatpush2.msra.mxu0 0.0
        %998 = vmatprep.subr.mxu0 0.0
        %999 = vmatpush2.msra.mxu0 0.0
        %1000 = vmatprep.subr.mxu0 0.0
        %1001 = vmatpush2.msra.mxu0 0.0
        %1002 = vmatprep.subr.mxu0 0.0
        %1003 = vmatpush2.msra.mxu0 0.0
        %1004 = vmatprep.subr.mxu0 0.0
        %1005 = vmatpush2.msra.mxu0 0.0
        %1006 = vmatprep.subr.mxu0 0.0
        %1007 = vmatpush2.msra.mxu0 0.0
        %1008 = vmatprep.subr.mxu0 0.0
        %1009 = vmatpush2.msra.mxu0 0.0
        %1010 = vmatprep.subr.mxu0 0.0
        %1011 = vmatpush2.msra.mxu0 0.0
        %1012 = vmatprep.subr.mxu0 0.0
        %1013 = vmatpush2.msra.mxu0 0.0
        %1014 = vmatprep.mubr.f32.mxu0 0.0
        %1015 = vmatmul.mubr.f32.gmra.mxu0 %v948
        %v1016 = vpop.f32.mrf.mxu0
        %v1017 = vadd.f32 0.0, %v1016
        %v1018 = vpop.f32.mrf.mxu0
        %1019 = vdwg.mxu0
        %1020 = vmatprep.subr.mxu0 0.0
        %1021 = vmatpush1.msra.mxu0 0.0
        %1022 = vmatprep.subr.mxu0 0.0
        %1023 = vmatpush1.msra.mxu0 0.0
        %1024 = vmatprep.subr.mxu0 0.0
        %1025 = vmatpush1.msra.mxu0 0.0
        %1026 = vmatprep.subr.mxu0 0.0
        %1027 = vmatpush1.msra.mxu0 0.0
        %1028 = vmatprep.subr.mxu0 0.0
        %1029 = vmatpush1.msra.mxu0 0.0
        %1030 = vmatprep.subr.mxu0 0.0
        %1031 = vmatpush1.msra.mxu0 0.0
        %1032 = vmatprep.subr.mxu0 0.0
        %1033 = vmatpush1.msra.mxu0 0.0
        %1034 = vmatprep.subr.mxu0 0.0
        %1035 = vmatpush1.msra.mxu0 0.0
        %1036 = vmatprep.subr.mxu0 0.0
        %1037 = vmatpush1.msra.mxu0 0.0
        %1038 = vmatprep.subr.mxu0 0.0
        %1039 = vmatpush1.msra.mxu0 0.0
        %1040 = vmatprep.subr.mxu0 0.0
        %1041 = vmatpush1.msra.mxu0 0.0
        %1042 = vmatprep.subr.mxu0 0.0
        %1043 = vmatpush1.msra.mxu0 0.0
        %1044 = vmatprep.subr.mxu0 0.0
        %1045 = vmatpush1.msra.mxu0 0.0
        %1046 = vmatprep.subr.mxu0 0.0
        %1047 = vmatpush1.msra.mxu0 0.0
        %1048 = vmatprep.subr.mxu0 0.0
        %1049 = vmatpush1.msra.mxu0 0.0
        %1050 = vmatprep.subr.mxu0 0.0
        %1051 = vmatpush1.msra.mxu0 %v381
        %1052 = vmatprep.subr.mxu0 0.0
        %1053 = vmatpush2.msra.mxu0 0.0
        %1054 = vmatprep.subr.mxu0 0.0
        %1055 = vmatpush2.msra.mxu0 0.0
        %1056 = vmatprep.subr.mxu0 0.0
        %1057 = vmatpush2.msra.mxu0 0.0
        %1058 = vmatprep.subr.mxu0 0.0
        %1059 = vmatpush2.msra.mxu0 0.0
        %1060 = vmatprep.subr.mxu0 0.0
        %1061 = vmatpush2.msra.mxu0 0.0
        %1062 = vmatprep.subr.mxu0 0.0
        %1063 = vmatpush2.msra.mxu0 0.0
        %1064 = vmatprep.subr.mxu0 0.0
        %1065 = vmatpush2.msra.mxu0 0.0
        %1066 = vmatprep.subr.mxu0 0.0
        %1067 = vmatpush2.msra.mxu0 0.0
        %1068 = vmatprep.subr.mxu0 0.0
        %1069 = vmatpush2.msra.mxu0 0.0
        %1070 = vmatprep.subr.mxu0 0.0
        %1071 = vmatpush2.msra.mxu0 0.0
        %1072 = vmatprep.subr.mxu0 0.0
        %1073 = vmatpush2.msra.mxu0 0.0
        %1074 = vmatprep.subr.mxu0 0.0
        %1075 = vmatpush2.msra.mxu0 0.0
        %1076 = vmatprep.subr.mxu0 0.0
        %1077 = vmatpush2.msra.mxu0 0.0
        %1078 = vmatprep.subr.mxu0 0.0
        %1079 = vmatpush2.msra.mxu0 0.0
        %1080 = vmatprep.subr.mxu0 0.0
        %1081 = vmatpush2.msra.mxu0 0.0
        %1082 = vmatprep.subr.mxu0 0.0
        %1083 = vmatpush2.msra.mxu0 0.0
        %1084 = vmatprep.mubr.f32.mxu0 0.0
        %1085 = vmatmul.mubr.f32.gmra.mxu0 %v948
        %v1086 = vpop.f32.mrf.mxu0
        %v1087 = vadd.f32 0.0, %v1086
        %v1088 = vpop.f32.mrf.mxu0
        %1089 = vdwg.mxu0
        %v1091 = vsel %vm306, %v1087, 0
        %1093 = vmatprep.subr.mxu0 0.0
        %1094 = vmatpush1.msra.mxu0 0.0
        %1095 = vmatprep.subr.mxu0 0.0
        %1096 = vmatpush1.msra.mxu0 0.0
        %1097 = vmatprep.subr.mxu0 0.0
        %1098 = vmatpush1.msra.mxu0 0.0
        %1099 = vmatprep.subr.mxu0 0.0
        %1100 = vmatpush1.msra.mxu0 0.0
        %1101 = vmatprep.subr.mxu0 0.0
        %1102 = vmatpush1.msra.mxu0 0.0
        %1103 = vmatprep.subr.mxu0 0.0
        %1104 = vmatpush1.msra.mxu0 0.0
        %1105 = vmatprep.subr.mxu0 0.0
        %1106 = vmatpush1.msra.mxu0 0.0
        %1107 = vmatprep.subr.mxu0 0.0
        %1108 = vmatpush1.msra.mxu0 0.0
        %1109 = vmatprep.subr.mxu0 0.0
        %1110 = vmatpush1.msra.mxu0 0.0
        %1111 = vmatprep.subr.mxu0 0.0
        %1112 = vmatpush1.msra.mxu0 0.0
        %1113 = vmatprep.subr.mxu0 0.0
        %1114 = vmatpush1.msra.mxu0 0.0
        %1115 = vmatprep.subr.mxu0 0.0
        %1116 = vmatpush1.msra.mxu0 0.0
        %1117 = vmatprep.subr.mxu0 0.0
        %1118 = vmatpush1.msra.mxu0 0.0
        %1119 = vmatprep.subr.mxu0 0.0
        %1120 = vmatpush1.msra.mxu0 0.0
        %1121 = vmatprep.subr.mxu0 0.0
        %1122 = vmatpush1.msra.mxu0 0.0
        %1123 = vmatprep.subr.mxu0 0.0
        %1124 = vmatpush1.msra.mxu0 %v1091
        %1125 = vmatprep.subr.mxu0 0.0
        %1126 = vmatpush2.msra.mxu0 0.0
        %1127 = vmatprep.subr.mxu0 0.0
        %1128 = vmatpush2.msra.mxu0 0.0
        %1129 = vmatprep.subr.mxu0 0.0
        %1130 = vmatpush2.msra.mxu0 0.0
        %1131 = vmatprep.subr.mxu0 0.0
        %1132 = vmatpush2.msra.mxu0 0.0
        %1133 = vmatprep.subr.mxu0 0.0
        %1134 = vmatpush2.msra.mxu0 0.0
        %1135 = vmatprep.subr.mxu0 0.0
        %1136 = vmatpush2.msra.mxu0 0.0
        %1137 = vmatprep.subr.mxu0 0.0
        %1138 = vmatpush2.msra.mxu0 0.0
        %1139 = vmatprep.subr.mxu0 0.0
        %1140 = vmatpush2.msra.mxu0 0.0
        %1141 = vmatprep.subr.mxu0 0.0
        %1142 = vmatpush2.msra.mxu0 0.0
        %1143 = vmatprep.subr.mxu0 0.0
        %1144 = vmatpush2.msra.mxu0 0.0
        %1145 = vmatprep.subr.mxu0 0.0
        %1146 = vmatpush2.msra.mxu0 0.0
        %1147 = vmatprep.subr.mxu0 0.0
        %1148 = vmatpush2.msra.mxu0 0.0
        %1149 = vmatprep.subr.mxu0 0.0
        %1150 = vmatpush2.msra.mxu0 0.0
        %1151 = vmatprep.subr.mxu0 0.0
        %1152 = vmatpush2.msra.mxu0 0.0
        %1153 = vmatprep.subr.mxu0 0.0
        %1154 = vmatpush2.msra.mxu0 0.0
        %1155 = vmatprep.subr.mxu0 0.0
        %1156 = vmatpush2.msra.mxu0 0.0
        %1157 = vmatprep.mubr.f32.mxu0 0.0
        %1158 = vmatmul.mubr.f32.gmra.mxu0 %v454
        %v1159 = vpop.f32.mrf.mxu0
        %v1160 = vadd.f32 0.0, %v1159
        %v1161 = vpop.f32.mrf.mxu0
        %1162 = vmatprep.mubr.f32.mxu0 0.0
        %1163 = vmatmul.mubr.f32.gmra.mxu0 %v457
        %v1164 = vpop.f32.mrf.mxu0
        %v1165 = vadd.f32 0.0, %v1164
        %v1166 = vpop.f32.mrf.mxu0
        %1167 = vdwg.mxu0
        %v1169 = vsel %vm306, %v1017, 0
        %1171 = vmatprep.subr.mxu0 0.0
        %1172 = vmatpush1.msra.mxu0 0.0
        %1173 = vmatprep.subr.mxu0 0.0
        %1174 = vmatpush1.msra.mxu0 0.0
        %1175 = vmatprep.subr.mxu0 0.0
        %1176 = vmatpush1.msra.mxu0 0.0
        %1177 = vmatprep.subr.mxu0 0.0
        %1178 = vmatpush1.msra.mxu0 0.0
        %1179 = vmatprep.subr.mxu0 0.0
        %1180 = vmatpush1.msra.mxu0 0.0
        %1181 = vmatprep.subr.mxu0 0.0
        %1182 = vmatpush1.msra.mxu0 0.0
        %1183 = vmatprep.subr.mxu0 0.0
        %1184 = vmatpush1.msra.mxu0 0.0
        %1185 = vmatprep.subr.mxu0 0.0
        %1186 = vmatpush1.msra.mxu0 0.0
        %1187 = vmatprep.subr.mxu0 0.0
        %1188 = vmatpush1.msra.mxu0 0.0
        %1189 = vmatprep.subr.mxu0 0.0
        %1190 = vmatpush1.msra.mxu0 0.0
        %1191 = vmatprep.subr.mxu0 0.0
        %1192 = vmatpush1.msra.mxu0 0.0
        %1193 = vmatprep.subr.mxu0 0.0
        %1194 = vmatpush1.msra.mxu0 0.0
        %1195 = vmatprep.subr.mxu0 0.0
        %1196 = vmatpush1.msra.mxu0 0.0
        %1197 = vmatprep.subr.mxu0 0.0
        %1198 = vmatpush1.msra.mxu0 0.0
        %1199 = vmatprep.subr.mxu0 0.0
        %1200 = vmatpush1.msra.mxu0 0.0
        %1201 = vmatprep.subr.mxu0 0.0
        %1202 = vmatpush1.msra.mxu0 %v1169
        %1203 = vmatprep.subr.mxu0 0.0
        %1204 = vmatpush2.msra.mxu0 0.0
        %1205 = vmatprep.subr.mxu0 0.0
        %1206 = vmatpush2.msra.mxu0 0.0
        %1207 = vmatprep.subr.mxu0 0.0
        %1208 = vmatpush2.msra.mxu0 0.0
        %1209 = vmatprep.subr.mxu0 0.0
        %1210 = vmatpush2.msra.mxu0 0.0
        %1211 = vmatprep.subr.mxu0 0.0
        %1212 = vmatpush2.msra.mxu0 0.0
        %1213 = vmatprep.subr.mxu0 0.0
        %1214 = vmatpush2.msra.mxu0 0.0
        %1215 = vmatprep.subr.mxu0 0.0
        %1216 = vmatpush2.msra.mxu0 0.0
        %1217 = vmatprep.subr.mxu0 0.0
        %1218 = vmatpush2.msra.mxu0 0.0
        %1219 = vmatprep.subr.mxu0 0.0
        %1220 = vmatpush2.msra.mxu0 0.0
        %1221 = vmatprep.subr.mxu0 0.0
        %1222 = vmatpush2.msra.mxu0 0.0
        %1223 = vmatprep.subr.mxu0 0.0
        %1224 = vmatpush2.msra.mxu0 0.0
        %1225 = vmatprep.subr.mxu0 0.0
        %1226 = vmatpush2.msra.mxu0 0.0
        %1227 = vmatprep.subr.mxu0 0.0
        %1228 = vmatpush2.msra.mxu0 0.0
        %1229 = vmatprep.subr.mxu0 0.0
        %1230 = vmatpush2.msra.mxu0 0.0
        %1231 = vmatprep.subr.mxu0 0.0
        %1232 = vmatpush2.msra.mxu0 0.0
        %1233 = vmatprep.subr.mxu0 0.0
        %1234 = vmatpush2.msra.mxu0 0.0
        %1235 = vmatprep.mubr.f32.mxu0 0.0
        %1236 = vmatmul.mubr.f32.gmra.mxu0 %v538
        %v1237 = vpop.f32.mrf.mxu0
        %v1238 = vadd.f32 %v1160, %v1237
        %v1239 = vpop.f32.mrf.mxu0
        %1240 = vmatprep.mubr.f32.mxu0 0.0
        %1241 = vmatmul.mubr.f32.gmra.mxu0 %v541
        %v1242 = vpop.f32.mrf.mxu0
        %v1243 = vadd.f32 %v1165, %v1242
        %v1244 = vpop.f32.mrf.mxu0
        %1245 = vdwg.mxu0
        %s1246 = scalar_lea.vmem %s253, 32 [#allocation2]
        %v1247 = vld [vmem:[%s1246] sm:$0xff]
        %v1248 = vld [vmem:[%s1246 + $0x8] sm:$0xff]
        %v1249 = vadd.f32 %v1247, %v1238
        %v1250 = vadd.f32 %v1248, %v1243
        %v1251 = vmax.f32 %v1249, 0.0
        %v1252 = vmax.f32 %v1250, 0.0
        %v1253 = vmin.f32 %v1251, 1.0
        %v1254 = vmin.f32 %v1252, 1.0
        %s1255 = scalar_lea.vmem %s286, 32 [#allocation5]
        %1256 = vst.msk [vmem:[%s1255] sm:$0xff] %vm629, %v1253
        %1257 = vst.msk [vmem:[%s1255 + $0x8] sm:$0xff] %vm629, %v1254
        %s1258 = scalar_lea.vmem %s292, 6
        %v1259 = vld [vmem:[%s1258] sm:$0x3]
        %v1261 = vsel %vm302, %v1259, 0
        %1263 = vmatprep.subr.mxu0 0.0
        %1264 = vmatpush1.msra.mxu0 0.0
        %1265 = vmatprep.subr.mxu0 0.0
        %1266 = vmatpush1.msra.mxu0 0.0
        %1267 = vmatprep.subr.mxu0 0.0
        %1268 = vmatpush1.msra.mxu0 0.0
        %1269 = vmatprep.subr.mxu0 0.0
        %1270 = vmatpush1.msra.mxu0 0.0
        %1271 = vmatprep.subr.mxu0 0.0
        %1272 = vmatpush1.msra.mxu0 0.0
        %1273 = vmatprep.subr.mxu0 0.0
        %1274 = vmatpush1.msra.mxu0 0.0
        %1275 = vmatprep.subr.mxu0 0.0
        %1276 = vmatpush1.msra.mxu0 0.0
        %1277 = vmatprep.subr.mxu0 0.0
        %1278 = vmatpush1.msra.mxu0 0.0
        %1279 = vmatprep.subr.mxu0 0.0
        %1280 = vmatpush1.msra.mxu0 0.0
        %1281 = vmatprep.subr.mxu0 0.0
        %1282 = vmatpush1.msra.mxu0 0.0
        %1283 = vmatprep.subr.mxu0 0.0
        %1284 = vmatpush1.msra.mxu0 0.0
        %1285 = vmatprep.subr.mxu0 0.0
        %1286 = vmatpush1.msra.mxu0 0.0
        %1287 = vmatprep.subr.mxu0 0.0
        %1288 = vmatpush1.msra.mxu0 0.0
        %1289 = vmatprep.subr.mxu0 0.0
        %1290 = vmatpush1.msra.mxu0 0.0
        %1291 = vmatprep.subr.mxu0 0.0
        %1292 = vmatpush1.msra.mxu0 0.0
        %1293 = vmatprep.subr.mxu0 0.0
        %1294 = vmatpush1.msra.mxu0 %v308
        %1295 = vmatprep.subr.mxu0 0.0
        %1296 = vmatpush2.msra.mxu0 0.0
        %1297 = vmatprep.subr.mxu0 0.0
        %1298 = vmatpush2.msra.mxu0 0.0
        %1299 = vmatprep.subr.mxu0 0.0
        %1300 = vmatpush2.msra.mxu0 0.0
        %1301 = vmatprep.subr.mxu0 0.0
        %1302 = vmatpush2.msra.mxu0 0.0
        %1303 = vmatprep.subr.mxu0 0.0
        %1304 = vmatpush2.msra.mxu0 0.0
        %1305 = vmatprep.subr.mxu0 0.0
        %1306 = vmatpush2.msra.mxu0 0.0
        %1307 = vmatprep.subr.mxu0 0.0
        %1308 = vmatpush2.msra.mxu0 0.0
        %1309 = vmatprep.subr.mxu0 0.0
        %1310 = vmatpush2.msra.mxu0 0.0
        %1311 = vmatprep.subr.mxu0 0.0
        %1312 = vmatpush2.msra.mxu0 0.0
        %1313 = vmatprep.subr.mxu0 0.0
        %1314 = vmatpush2.msra.mxu0 0.0
        %1315 = vmatprep.subr.mxu0 0.0
        %1316 = vmatpush2.msra.mxu0 0.0
        %1317 = vmatprep.subr.mxu0 0.0
        %1318 = vmatpush2.msra.mxu0 0.0
        %1319 = vmatprep.subr.mxu0 0.0
        %1320 = vmatpush2.msra.mxu0 0.0
        %1321 = vmatprep.subr.mxu0 0.0
        %1322 = vmatpush2.msra.mxu0 0.0
        %1323 = vmatprep.subr.mxu0 0.0
        %1324 = vmatpush2.msra.mxu0 0.0
        %1325 = vmatprep.subr.mxu0 0.0
        %1326 = vmatpush2.msra.mxu0 0.0
        %1327 = vmatprep.mubr.f32.mxu0 0.0
        %1328 = vmatmul.mubr.f32.gmra.mxu0 %v1261
        %v1329 = vpop.f32.mrf.mxu0
        %v1330 = vadd.f32 0.0, %v1329
        %v1331 = vpop.f32.mrf.mxu0
        %1332 = vdwg.mxu0
        %1333 = vmatprep.subr.mxu0 0.0
        %1334 = vmatpush1.msra.mxu0 0.0
        %1335 = vmatprep.subr.mxu0 0.0
        %1336 = vmatpush1.msra.mxu0 0.0
        %1337 = vmatprep.subr.mxu0 0.0
        %1338 = vmatpush1.msra.mxu0 0.0
        %1339 = vmatprep.subr.mxu0 0.0
        %1340 = vmatpush1.msra.mxu0 0.0
        %1341 = vmatprep.subr.mxu0 0.0
        %1342 = vmatpush1.msra.mxu0 0.0
        %1343 = vmatprep.subr.mxu0 0.0
        %1344 = vmatpush1.msra.mxu0 0.0
        %1345 = vmatprep.subr.mxu0 0.0
        %1346 = vmatpush1.msra.mxu0 0.0
        %1347 = vmatprep.subr.mxu0 0.0
        %1348 = vmatpush1.msra.mxu0 0.0
        %1349 = vmatprep.subr.mxu0 0.0
        %1350 = vmatpush1.msra.mxu0 0.0
        %1351 = vmatprep.subr.mxu0 0.0
        %1352 = vmatpush1.msra.mxu0 0.0
        %1353 = vmatprep.subr.mxu0 0.0
        %1354 = vmatpush1.msra.mxu0 0.0
        %1355 = vmatprep.subr.mxu0 0.0
        %1356 = vmatpush1.msra.mxu0 0.0
        %1357 = vmatprep.subr.mxu0 0.0
        %1358 = vmatpush1.msra.mxu0 0.0
        %1359 = vmatprep.subr.mxu0 0.0
        %1360 = vmatpush1.msra.mxu0 0.0
        %1361 = vmatprep.subr.mxu0 0.0
        %1362 = vmatpush1.msra.mxu0 0.0
        %1363 = vmatprep.subr.mxu0 0.0
        %1364 = vmatpush1.msra.mxu0 %v381
        %1365 = vmatprep.subr.mxu0 0.0
        %1366 = vmatpush2.msra.mxu0 0.0
        %1367 = vmatprep.subr.mxu0 0.0
        %1368 = vmatpush2.msra.mxu0 0.0
        %1369 = vmatprep.subr.mxu0 0.0
        %1370 = vmatpush2.msra.mxu0 0.0
        %1371 = vmatprep.subr.mxu0 0.0
        %1372 = vmatpush2.msra.mxu0 0.0
        %1373 = vmatprep.subr.mxu0 0.0
        %1374 = vmatpush2.msra.mxu0 0.0
        %1375 = vmatprep.subr.mxu0 0.0
        %1376 = vmatpush2.msra.mxu0 0.0
        %1377 = vmatprep.subr.mxu0 0.0
        %1378 = vmatpush2.msra.mxu0 0.0
        %1379 = vmatprep.subr.mxu0 0.0
        %1380 = vmatpush2.msra.mxu0 0.0
        %1381 = vmatprep.subr.mxu0 0.0
        %1382 = vmatpush2.msra.mxu0 0.0
        %1383 = vmatprep.subr.mxu0 0.0
        %1384 = vmatpush2.msra.mxu0 0.0
        %1385 = vmatprep.subr.mxu0 0.0
        %1386 = vmatpush2.msra.mxu0 0.0
        %1387 = vmatprep.subr.mxu0 0.0
        %1388 = vmatpush2.msra.mxu0 0.0
        %1389 = vmatprep.subr.mxu0 0.0
        %1390 = vmatpush2.msra.mxu0 0.0
        %1391 = vmatprep.subr.mxu0 0.0
        %1392 = vmatpush2.msra.mxu0 0.0
        %1393 = vmatprep.subr.mxu0 0.0
        %1394 = vmatpush2.msra.mxu0 0.0
        %1395 = vmatprep.subr.mxu0 0.0
        %1396 = vmatpush2.msra.mxu0 0.0
        %1397 = vmatprep.mubr.f32.mxu0 0.0
        %1398 = vmatmul.mubr.f32.gmra.mxu0 %v1261
        %v1399 = vpop.f32.mrf.mxu0
        %v1400 = vadd.f32 0.0, %v1399
        %v1401 = vpop.f32.mrf.mxu0
        %1402 = vdwg.mxu0
        %v1404 = vsel %vm306, %v1400, 0
        %1406 = vmatprep.subr.mxu0 0.0
        %1407 = vmatpush1.msra.mxu0 0.0
        %1408 = vmatprep.subr.mxu0 0.0
        %1409 = vmatpush1.msra.mxu0 0.0
        %1410 = vmatprep.subr.mxu0 0.0
        %1411 = vmatpush1.msra.mxu0 0.0
        %1412 = vmatprep.subr.mxu0 0.0
        %1413 = vmatpush1.msra.mxu0 0.0
        %1414 = vmatprep.subr.mxu0 0.0
        %1415 = vmatpush1.msra.mxu0 0.0
        %1416 = vmatprep.subr.mxu0 0.0
        %1417 = vmatpush1.msra.mxu0 0.0
        %1418 = vmatprep.subr.mxu0 0.0
        %1419 = vmatpush1.msra.mxu0 0.0
        %1420 = vmatprep.subr.mxu0 0.0
        %1421 = vmatpush1.msra.mxu0 0.0
        %1422 = vmatprep.subr.mxu0 0.0
        %1423 = vmatpush1.msra.mxu0 0.0
        %1424 = vmatprep.subr.mxu0 0.0
        %1425 = vmatpush1.msra.mxu0 0.0
        %1426 = vmatprep.subr.mxu0 0.0
        %1427 = vmatpush1.msra.mxu0 0.0
        %1428 = vmatprep.subr.mxu0 0.0
        %1429 = vmatpush1.msra.mxu0 0.0
        %1430 = vmatprep.subr.mxu0 0.0
        %1431 = vmatpush1.msra.mxu0 0.0
        %1432 = vmatprep.subr.mxu0 0.0
        %1433 = vmatpush1.msra.mxu0 0.0
        %1434 = vmatprep.subr.mxu0 0.0
        %1435 = vmatpush1.msra.mxu0 0.0
        %1436 = vmatprep.subr.mxu0 0.0
        %1437 = vmatpush1.msra.mxu0 %v1404
        %1438 = vmatprep.subr.mxu0 0.0
        %1439 = vmatpush2.msra.mxu0 0.0
        %1440 = vmatprep.subr.mxu0 0.0
        %1441 = vmatpush2.msra.mxu0 0.0
        %1442 = vmatprep.subr.mxu0 0.0
        %1443 = vmatpush2.msra.mxu0 0.0
        %1444 = vmatprep.subr.mxu0 0.0
        %1445 = vmatpush2.msra.mxu0 0.0
        %1446 = vmatprep.subr.mxu0 0.0
        %1447 = vmatpush2.msra.mxu0 0.0
        %1448 = vmatprep.subr.mxu0 0.0
        %1449 = vmatpush2.msra.mxu0 0.0
        %1450 = vmatprep.subr.mxu0 0.0
        %1451 = vmatpush2.msra.mxu0 0.0
        %1452 = vmatprep.subr.mxu0 0.0
        %1453 = vmatpush2.msra.mxu0 0.0
        %1454 = vmatprep.subr.mxu0 0.0
        %1455 = vmatpush2.msra.mxu0 0.0
        %1456 = vmatprep.subr.mxu0 0.0
        %1457 = vmatpush2.msra.mxu0 0.0
        %1458 = vmatprep.subr.mxu0 0.0
        %1459 = vmatpush2.msra.mxu0 0.0
        %1460 = vmatprep.subr.mxu0 0.0
        %1461 = vmatpush2.msra.mxu0 0.0
        %1462 = vmatprep.subr.mxu0 0.0
        %1463 = vmatpush2.msra.mxu0 0.0
        %1464 = vmatprep.subr.mxu0 0.0
        %1465 = vmatpush2.msra.mxu0 0.0
        %1466 = vmatprep.subr.mxu0 0.0
        %1467 = vmatpush2.msra.mxu0 0.0
        %1468 = vmatprep.subr.mxu0 0.0
        %1469 = vmatpush2.msra.mxu0 0.0
        %1470 = vmatprep.mubr.f32.mxu0 0.0
        %1471 = vmatmul.mubr.f32.gmra.mxu0 %v454
        %v1472 = vpop.f32.mrf.mxu0
        %v1473 = vadd.f32 0.0, %v1472
        %v1474 = vpop.f32.mrf.mxu0
        %1475 = vmatprep.mubr.f32.mxu0 0.0
        %1476 = vmatmul.mubr.f32.gmra.mxu0 %v457
        %v1477 = vpop.f32.mrf.mxu0
        %v1478 = vadd.f32 0.0, %v1477
        %v1479 = vpop.f32.mrf.mxu0
        %1480 = vdwg.mxu0
        %v1482 = vsel %vm306, %v1330, 0
        %1484 = vmatprep.subr.mxu0 0.0
        %1485 = vmatpush1.msra.mxu0 0.0
        %1486 = vmatprep.subr.mxu0 0.0
        %1487 = vmatpush1.msra.mxu0 0.0
        %1488 = vmatprep.subr.mxu0 0.0
        %1489 = vmatpush1.msra.mxu0 0.0
        %1490 = vmatprep.subr.mxu0 0.0
        %1491 = vmatpush1.msra.mxu0 0.0
        %1492 = vmatprep.subr.mxu0 0.0
        %1493 = vmatpush1.msra.mxu0 0.0
        %1494 = vmatprep.subr.mxu0 0.0
        %1495 = vmatpush1.msra.mxu0 0.0
        %1496 = vmatprep.subr.mxu0 0.0
        %1497 = vmatpush1.msra.mxu0 0.0
        %1498 = vmatprep.subr.mxu0 0.0
        %1499 = vmatpush1.msra.mxu0 0.0
        %1500 = vmatprep.subr.mxu0 0.0
        %1501 = vmatpush1.msra.mxu0 0.0
        %1502 = vmatprep.subr.mxu0 0.0
        %1503 = vmatpush1.msra.mxu0 0.0
        %1504 = vmatprep.subr.mxu0 0.0
        %1505 = vmatpush1.msra.mxu0 0.0
        %1506 = vmatprep.subr.mxu0 0.0
        %1507 = vmatpush1.msra.mxu0 0.0
        %1508 = vmatprep.subr.mxu0 0.0
        %1509 = vmatpush1.msra.mxu0 0.0
        %1510 = vmatprep.subr.mxu0 0.0
        %1511 = vmatpush1.msra.mxu0 0.0
        %1512 = vmatprep.subr.mxu0 0.0
        %1513 = vmatpush1.msra.mxu0 0.0
        %1514 = vmatprep.subr.mxu0 0.0
        %1515 = vmatpush1.msra.mxu0 %v1482
        %1516 = vmatprep.subr.mxu0 0.0
        %1517 = vmatpush2.msra.mxu0 0.0
        %1518 = vmatprep.subr.mxu0 0.0
        %1519 = vmatpush2.msra.mxu0 0.0
        %1520 = vmatprep.subr.mxu0 0.0
        %1521 = vmatpush2.msra.mxu0 0.0
        %1522 = vmatprep.subr.mxu0 0.0
        %1523 = vmatpush2.msra.mxu0 0.0
        %1524 = vmatprep.subr.mxu0 0.0
        %1525 = vmatpush2.msra.mxu0 0.0
        %1526 = vmatprep.subr.mxu0 0.0
        %1527 = vmatpush2.msra.mxu0 0.0
        %1528 = vmatprep.subr.mxu0 0.0
        %1529 = vmatpush2.msra.mxu0 0.0
        %1530 = vmatprep.subr.mxu0 0.0
        %1531 = vmatpush2.msra.mxu0 0.0
        %1532 = vmatprep.subr.mxu0 0.0
        %1533 = vmatpush2.msra.mxu0 0.0
        %1534 = vmatprep.subr.mxu0 0.0
        %1535 = vmatpush2.msra.mxu0 0.0
        %1536 = vmatprep.subr.mxu0 0.0
        %1537 = vmatpush2.msra.mxu0 0.0
        %1538 = vmatprep.subr.mxu0 0.0
        %1539 = vmatpush2.msra.mxu0 0.0
        %1540 = vmatprep.subr.mxu0 0.0
        %1541 = vmatpush2.msra.mxu0 0.0
        %1542 = vmatprep.subr.mxu0 0.0
        %1543 = vmatpush2.msra.mxu0 0.0
        %1544 = vmatprep.subr.mxu0 0.0
        %1545 = vmatpush2.msra.mxu0 0.0
        %1546 = vmatprep.subr.mxu0 0.0
        %1547 = vmatpush2.msra.mxu0 0.0
        %1548 = vmatprep.mubr.f32.mxu0 0.0
        %1549 = vmatmul.mubr.f32.gmra.mxu0 %v538
        %v1550 = vpop.f32.mrf.mxu0
        %v1551 = vadd.f32 %v1473, %v1550
        %v1552 = vpop.f32.mrf.mxu0
        %1553 = vmatprep.mubr.f32.mxu0 0.0
        %1554 = vmatmul.mubr.f32.gmra.mxu0 %v541
        %v1555 = vpop.f32.mrf.mxu0
        %v1556 = vadd.f32 %v1478, %v1555
        %v1557 = vpop.f32.mrf.mxu0
        %1558 = vdwg.mxu0
        %s1559 = scalar_lea.vmem %s253, 48 [#allocation2]
        %v1560 = vld [vmem:[%s1559] sm:$0xff]
        %v1561 = vld [vmem:[%s1559 + $0x8] sm:$0xff]
        %v1562 = vadd.f32 %v1560, %v1551
        %v1563 = vadd.f32 %v1561, %v1556
        %v1564 = vmax.f32 %v1562, 0.0
        %v1565 = vmax.f32 %v1563, 0.0
        %v1566 = vmin.f32 %v1564, 1.0
        %v1567 = vmin.f32 %v1565, 1.0
        %s1568 = scalar_lea.vmem %s286, 48 [#allocation5]
        %1569 = vst.msk [vmem:[%s1568] sm:$0xff] %vm629, %v1566
        %1570 = vst.msk [vmem:[%s1568 + $0x8] sm:$0xff] %vm629, %v1567
        %s1571 = sand.u32 %s167, 1
        %s1572 = scalar_lea.sflag [#allocation4], %s1571
        %s1573 = sand.u32 %s167, 1
        %s1574 = smul.addr %s1573, 64
        %s1575 = scalar_lea.vmem [#allocation5], %s1574
        // Predicated region
        $region49: #{tpu_custom_call.1} parent=43 // pred_check
          %p1576 = pneg %p177
        $region50: #{tpu_custom_call.1} parent=43 // pred_check_branch
          %1578 = sbr.rel (%p1576) target = $region52
        $region51: #{tpu_custom_call.1} parent=43 // pred_region
          %s1579 = smul.u32 4, %s23
          %s1581 = ssub.s32 1024, 1024
          %1582 = vsyncadd %s1572, %s1581
          %s1583 = smul.addr %s1579, 2
          %s1584 = smul.addr %s1583, 128
          %s1585 = scalar_lea.hbm %s6, %s1584
          %s1586 = sshll.u32 %s1575, 4
          %s1587 = int_to_ptr.vmem [resolvable:$true] %s1586
          %1592 = dma.vmem_to_hbm [thread:$0]  %s1587, 1024, %s1585, %s1572, 128, 128, 8
        $region52: #{tpu_custom_call.1} parent=43 // pred_fallthru
          _
      $region44: #{tpu_custom_call.1} parent=5 // pred_fallthru
        _
      %p1593 = scmp.le.s32.totalorder 2, %s18
      // Predicated region
      $region53: #{tpu_custom_call.1} parent=5 // pred_check
        %p1594 = pneg %p1593
      $region54: #{tpu_custom_call.1} parent=5 // pred_check_branch
        %1596 = sbr.rel (%p1594) target = $region56
      $region55: #{tpu_custom_call.1} parent=5 // pred_region
        %s1597 = ssub.s32 %s18, 2
        // Predicated region
        $region57: #{tpu_custom_call.1} parent=55 // pred_check
          %p1598 = pneg %p183
        $region58: #{tpu_custom_call.1} parent=55 // pred_check_branch
          %1600 = sbr.rel (%p1598) target = $region60
        $region59: #{tpu_custom_call.1} parent=55 // pred_region
          %s1601 = sand.u32 %s168, 1
          %s1602 = scalar_lea.sflag [#allocation4], %s1601
          %s1603 = sand.u32 %s168, 1
          %s1604 = smul.addr %s1603, 64
          %s1605 = scalar_lea.vmem [#allocation5], %s1604
          %1606 = dma.done %s1602, 1024
        $region60: #{tpu_custom_call.1} parent=55 // pred_fallthru
          _
      $region56: #{tpu_custom_call.1} parent=5 // pred_fallthru
        _
    $region6: #{tpu_custom_call.1} parent=1 // loop_footer
      %s22 = sadd.s32 1, %s18
    $region7: #{tpu_custom_call.1} parent=1 // loop_footer_branch
      %17 = sbr.rel target = $region3
    $region8: #{tpu_custom_call.1} parent=1 // loop_exit
      _
    %1607 = vsyncpa [#allocation3], 1
    %s1608 = scalar_lea.sflag [#allocation3], 1
    %1609 = vsyncpa %s1608, 1
    %1610 = vsyncpa [#allocation4], 1
    %s1611 = scalar_lea.sflag [#allocation4], 1
    %1612 = vsyncpa %s1611, 1

</llo_original>
